<compile_context>
chip_gen: v7x
topology: tpu7x:2x2x1
jax: 0.10.0
libtpu: 0.0.40
codegen_flags: <defaults>
</compile_context>

<pallas_src>
import jax
import jax.numpy as jnp
from jax.experimental import pallas as pl
from jax.experimental.pallas import tpu as pltpu


def _fusion_kernel(v_ref, q_ref, o_ref):
    # Elementwise Hadamard fusion on the VPU. Promotion to the output dtype is
    # done in vregs (compute slack everywhere for a mem-bound op), so inputs
    # travel HBM->VMEM at their native width.
    acc = o_ref.dtype
    o_ref[...] = v_ref[...].astype(acc) * q_ref[...].astype(acc)


# Below this many elements, XLA's fused elementwise multiply beats a
# pallas_call (per-step + launch overhead dominates).
# TODO(synk): a standalone elementwise multiply can at best tie XLA at the HBM
#             roofline; the Pallas path earns its keep only once fused into a
#             larger kernel (e.g. a following projection). Benchmark per chip
#             and raise this threshold if Pallas doesn't win.
_MIN_PALLAS_ELEMS = 64 * 1024

# Minimum number of grid steps we try to keep so v7x's 2 TensorCores can split
# the stream (and the pipeline stays busy). Harmless on single-TC v5e/v6e.
_MIN_GRID_STEPS = 4


def _chip_budgets():
    """Returns (per-operand block bytes, vmem_limit_bytes) per TPU generation."""
    vmem_phys = None
    try:
        vmem_phys = int(pltpu.get_tpu_info().vmem_capacity_bytes)
    except Exception:
        vmem_phys = None
    if vmem_phys is None:
        try:
            kind = jax.devices()[0].device_kind.lower()
            # v5e / v6e have 128 MiB VMEM per TensorCore; v7x only 64 MiB.
            vmem_phys = (128 << 20) if ("v5" in kind or "v6" in kind) else (64 << 20)
        except Exception:
            vmem_phys = 64 << 20
    if vmem_phys >= (128 << 20):
        # v5e / v6e: 8 MiB per-operand blocks -> 3 operands x 2 buffers = 48 MiB
        # live, under the 64 MiB scoped limit and far under 128 MiB physical.
        return 8 << 20, 64 << 20
    # v7x: 4 MiB blocks -> 24 MiB live; cap the scoped limit at 48 MiB so the
    # compiler keeps headroom for internal scratch inside 64 MiB physical.
    return 4 << 20, 48 << 20


def _tiled_fusion_2d(v2d, q2d, out_dtype):
    """Row-tiled, double-buffered elementwise fusion of two 2-D arrays."""
    rows, cols = v2d.shape
    target_block_bytes, vmem_limit = _chip_budgets()
    itemsize = jnp.dtype(out_dtype).itemsize
    bytes_per_row = cols * itemsize

    # Huge-row guard: even the minimum 8-row block (x3 operands x2 buffers)
    # would not fit the VMEM budget -> let XLA's fused multiply handle it.
    # TODO(synk): tile the column dimension too (2-D grid) for extremely wide rows.
    if 6 * 8 * bytes_per_row > vmem_limit:
        return v2d.astype(out_dtype) * q2d.astype(out_dtype)

    # Row budget from the per-operand block budget, 8-sublane aligned.
    tile_rows = max(8, target_block_bytes // bytes_per_row)
    tile_rows -= tile_rows % 8

    # Keep the grid >= _MIN_GRID_STEPS steps when rows permit so the
    # "parallel" axis actually feeds both v7x TensorCores.
    if rows >= 8 * _MIN_GRID_STEPS:
        min_steps = _MIN_GRID_STEPS
    elif rows >= 8 * 2:
        min_steps = 2
    else:
        min_steps = 1
    if min_steps > 1:
        cap = (rows // min_steps) - ((rows // min_steps) % 8)
        tile_rows = min(tile_rows, max(cap, 8))

    tile_rows = min(tile_rows, rows)  # block == full array dim is always legal
    grid = (pl.cdiv(rows, tile_rows),)

    spec = pl.BlockSpec((tile_rows, cols), lambda i: (i, 0))
    return pl.pallas_call(
        _fusion_kernel,
        out_shape=jax.ShapeDtypeStruct((rows, cols), out_dtype),
        grid=grid,
        in_specs=[spec, spec],
        out_specs=spec,
        compiler_params=pltpu.CompilerParams(
            dimension_semantics=("parallel",),  # megacore sharding on v7x
            vmem_limit_bytes=vmem_limit,
        ),
    )(v2d, q2d)


def abstract_fusion(input_v, input_q):
    """Fuses two (batch, hidden) activations elementwise via a Pallas kernel."""
    assert input_v.shape == input_q.shape, "modalities must have matching shapes"
    out_dtype = jnp.result_type(input_v.dtype, input_q.dtype)

    B, H = input_v.shape
    total = B * H

    # Tiny inputs: launch overhead dwarfs the work; let XLA fuse it.
    if total < _MIN_PALLAS_ELEMS:
        return input_v.astype(out_dtype) * input_q.astype(out_dtype)

    # Lane-dense view: present the widest last dim (multiple of 128) that
    # divides the element count, so output stores are fat unmasked vst and
    # DMA descriptors are few and large.
    cols = None
    for c in (4096, 2048, 1024, 512, 256, 128):
        if total % c == 0:
            cols = c
            break
    use_flat = cols is not None and (H % 128 != 0 or cols > H)

    if use_flat:
        out2d = _tiled_fusion_2d(
            input_v.reshape(-1, cols), input_q.reshape(-1, cols), out_dtype
        )
        return out2d.reshape(B, H)

    # H already lane-friendly (or total can't be reshaped): tile batch as-is.
    return _tiled_fusion_2d(input_v, input_q, out_dtype)


if __name__ == "__main__":
    key = jax.random.PRNGKey(0)
    kv, kq, kv2, kq2, kv3, kq3 = jax.random.split(key, 6)

    # 1) Small demo shape implied by the module (batch=2, hidden=32).
    #    Exercises the tiny-input fast path (plain XLA-fused multiply).
    batch, hidden = 2, 32
    input_v = jax.random.normal(kv, (batch, hidden), dtype=jnp.float32)
    input_q = jax.random.normal(kq, (batch, hidden), dtype=jnp.float32)
    out_small = abstract_fusion(input_v, input_q)
    jax.block_until_ready(out_small)
    assert out_small.shape == (batch, hidden)
    assert jnp.allclose(out_small, input_v * input_q, atol=1e-6)

    # 2) Larger f32 shape exercising the tiled Pallas path: flattened to a
    #    lane-dense (256, 4096) view, grid >= 4 steps (both v7x TCs busy).
    big_b, big_h = 2048, 512
    big_v = jax.random.normal(kv2, (big_b, big_h), dtype=jnp.float32)
    big_q = jax.random.normal(kq2, (big_b, big_h), dtype=jnp.float32)
    out_big = abstract_fusion(big_v, big_q)
    jax.block_until_ready(out_big)
    assert out_big.shape == (big_b, big_h)
    assert jnp.allclose(out_big, big_v * big_q, atol=1e-6), "mismatch vs reference"

    # 3) Mixed-precision inputs (bf16 x f32): promotion now happens inside the
    #    kernel, so the bf16 operand streams from HBM at half width.
    mb, mh = 1024, 384
    mv = jax.random.normal(kv3, (mb, mh), dtype=jnp.bfloat16)
    mq = jax.random.normal(kq3, (mb, mh), dtype=jnp.float32)
    out_mixed = abstract_fusion(mv, mq)
    jax.block_until_ready(out_mixed)
    assert out_mixed.shape == (mb, mh)
    assert out_mixed.dtype == jnp.float32
    ref_mixed = mv.astype(jnp.float32) * mq
    assert jnp.allclose(out_mixed, ref_mixed, atol=1e-6), "mixed-dtype mismatch"

    print("KERNEL_OK")
</pallas_src>

<mosaic_0001>
module attributes {stable_mosaic.version = 11 : i64} {
  func.func @_fusion_kernel(%arg0: i32, %arg1: memref<64x4096xf32, #tpu.memory_space<vmem>>, %arg2: memref<64x4096xf32, #tpu.memory_space<vmem>>, %arg3: memref<64x4096xf32, #tpu.memory_space<vmem>>) attributes {dimension_semantics = [#tpu.dimension_semantics<parallel>], iteration_bounds = array<i64: 4>, scalar_prefetch = 0 : i64, scratch_operands = 0 : i64, tpu.core_type = #tpu.core_type<tc>, window_params = [{transform_indices = @transform_0, window_bounds = array<i64: 64, 4096>}, {transform_indices = @transform_1, window_bounds = array<i64: 64, 4096>}, {transform_indices = @transform_2, window_bounds = array<i64: 64, 4096>}]} {
    %c0 = arith.constant 0 : index
    %c0_0 = arith.constant 0 : index
    %0 = vector.load %arg1[%c0, %c0_0] : memref<64x4096xf32, #tpu.memory_space<vmem>>, vector<64x4096xf32>
    %c0_1 = arith.constant 0 : index
    %c0_2 = arith.constant 0 : index
    %1 = vector.load %arg2[%c0_1, %c0_2] : memref<64x4096xf32, #tpu.memory_space<vmem>>, vector<64x4096xf32>
    %2 = arith.mulf %0, %1 : vector<64x4096xf32>
    %c0_3 = arith.constant 0 : index
    %c0_4 = arith.constant 0 : index
    %3 = vector.load %arg3[%c0_3, %c0_4] : memref<64x4096xf32, #tpu.memory_space<vmem>>, vector<64x4096xf32>
    tpu.vector_store %arg3[%c0_3, %c0_4], %2 {strides = array<i32>} : memref<64x4096xf32, #tpu.memory_space<vmem>>, vector<64x4096xf32>,
    return
  }
  func.func @transform_0(%arg0: i32) -> (i32, i32) {
    %c0_i32 = arith.constant 0 : i32
    %c0_i32_0 = arith.constant 0 : i32
    return %arg0, %c0_i32 : i32, i32
  }
  func.func @transform_1(%arg0: i32) -> (i32, i32) {
    %c0_i32 = arith.constant 0 : i32
    %c0_i32_0 = arith.constant 0 : i32
    return %arg0, %c0_i32 : i32, i32
  }
  func.func @transform_2(%arg0: i32) -> (i32, i32) {
    %c0_i32 = arith.constant 0 : i32
    %c0_i32_0 = arith.constant 0 : i32
    return %arg0, %c0_i32 : i32, i32
  }
}

</mosaic_0001>

<llo_original>
// kernel: tpu_custom_call.1
$region0: #{tpu_custom_call.1}
  #allocation0 [shape = 'u32[]', space=smem, size = 0x4, offset = 0x4, fixed_abs, tag = 'smem constant byte address 0x4 - core index']
  #allocation1 [shape = 'u32[144,128]{1,0:T(1,128)}', space=vmem, size = 0x12000, scoped, tag = 'internal scratch']
  %s0 = inlined_call_operand.hbm [shape: f32[256,4096], index: 0, kind: input, shape index: {}]
  %s1 = inlined_call_operand.hbm [shape: f32[256,4096], index: 1, kind: input, shape index: {}]
  %s2 = inlined_call_operand.hbm [shape: f32[256,4096], index: 2, kind: output, shape index: {}]
  %s3 = sld [smem:[#allocation0]]
  $region49: #{tpu_custom_call.1} parent=0
    _
  %s5 = ssub.s32 1, %s3
  %s6 = scalar_select 0, %s5, %s3
  $region1: #{tpu_custom_call.1} parent=0
    #allocation2 [shape = 'u8[2097152]{0}', space=vmem, size = 0x200000, scoped, tag = 'input window, operand 0']
    #allocation3 [shape = 's32[2]{0}', space=sflag, size = 0x8, scoped, tag = 'scoped memory for tpu_custom_call.1']
    #allocation4 [shape = 's32[2]{0}', space=sflag, size = 0x8, scoped, tag = 'scoped memory for tpu_custom_call.1']
    #allocation5 [shape = 'u8[2097152]{0}', space=vmem, size = 0x200000, scoped, tag = 'input window, operand 1']
    #allocation6 [shape = 's32[2]{0}', space=sflag, size = 0x8, scoped, tag = 'scoped memory for tpu_custom_call.1']
    #allocation7 [shape = 'u8[2097152]{0}', space=vmem, size = 0x200000, scoped, tag = 'output window, operand 0']
    %7 = vsyncpa [#allocation3], 0
    %s8 = scalar_lea.sflag [#allocation3], 1
    %9 = vsyncpa %s8, 0
    %10 = vsyncpa [#allocation6], 0
    %s11 = scalar_lea.sflag [#allocation6], 1
    %12 = vsyncpa %s11, 0
    %13 = vsyncpa [#allocation4], 0
    %s14 = scalar_lea.sflag [#allocation4], 1
    %15 = vsyncpa %s14, 0
    loop: start=0, step=1, limit=6
    $region2: #{tpu_custom_call.1} parent=1 // loop_pre_header
      _
    $region3: #{tpu_custom_call.1} parent=1 // loop_header
      %s17 = sphi 0, %s21
      %p18 = scmp.ge.s32.totalorder %s17, 6
      %s27 = sphi 0, %s29
      %s30 = sphi 0, %s27
      %s31 = sphi 0, %s30
      %s47 = sphi 0, %s31
      %s53 = sphi 0, %s55
      %s56 = sphi 0, %s53
      %s57 = sphi 0, %s56
      %s73 = sphi 0, %s57
      %s79 = sphi 0, %s81
      %s82 = sphi 0, %s79
      %s83 = sphi 0, %s82
      %s99 = sphi 0, %s83
    $region4: #{tpu_custom_call.1} parent=1 // loop_header_branch
      %20 = sbr.rel (%p18) target = $region8
    $region5: #{tpu_custom_call.1} parent=1 // loop_body
      %s22 = ssub.s32 %s17, 1
      %s23 = ssub.s32 %s17, 2
      %s24 = sadd.s32 %s17, 1
      %s25 = ssub.s32 %s17, %s24
      %p26 = scmp.eq.s32.totalorder %s25, 0
      %s28 = sadd.s32 %s27, 1
      %s29 = scalar_select %p26, %s27, %s28
      %p32 = pneg %p26
      %p33 = scmp.eq.s32.totalorder %s17, 3
      %p34 = por %p32, %p33
      %p35 = scmp.ne.s32.totalorder %s27, %s30
      %p36 = scmp.eq.s32.totalorder %s17, 0
      %p37 = por %p35, %p36
      %p38 = scmp.ne.s32.totalorder %s27, %s30
      %p39 = scmp.eq.s32.totalorder %s22, 3
      %p40 = por %p38, %p39
      %p41 = scmp.ne.s32.totalorder %s30, %s31
      %p42 = scmp.eq.s32.totalorder %s22, 0
      %p43 = por %p41, %p42
      %p44 = scmp.ne.s32.totalorder %s30, %s31
      %p45 = scmp.eq.s32.totalorder %s23, 3
      %p46 = por %p44, %p45
      %p48 = scmp.ne.s32.totalorder %s31, %s47
      %p49 = scmp.eq.s32.totalorder %s23, 0
      %p50 = por %p48, %p49
      %s51 = ssub.s32 %s17, %s24
      %p52 = scmp.eq.s32.totalorder %s51, 0
      %s54 = sadd.s32 %s53, 1
      %s55 = scalar_select %p52, %s53, %s54
      %p58 = pneg %p52
      %p59 = scmp.eq.s32.totalorder %s17, 3
      %p60 = por %p58, %p59
      %p61 = scmp.ne.s32.totalorder %s53, %s56
      %p62 = scmp.eq.s32.totalorder %s17, 0
      %p63 = por %p61, %p62
      %p64 = scmp.ne.s32.totalorder %s53, %s56
      %p65 = scmp.eq.s32.totalorder %s22, 3
      %p66 = por %p64, %p65
      %p67 = scmp.ne.s32.totalorder %s56, %s57
      %p68 = scmp.eq.s32.totalorder %s22, 0
      %p69 = por %p67, %p68
      %p70 = scmp.ne.s32.totalorder %s56, %s57
      %p71 = scmp.eq.s32.totalorder %s23, 3
      %p72 = por %p70, %p71
      %p74 = scmp.ne.s32.totalorder %s57, %s73
      %p75 = scmp.eq.s32.totalorder %s23, 0
      %p76 = por %p74, %p75
      %s77 = ssub.s32 %s17, %s24
      %p78 = scmp.eq.s32.totalorder %s77, 0
      %s80 = sadd.s32 %s79, 1
      %s81 = scalar_select %p78, %s79, %s80
      %p84 = pneg %p78
      %p85 = scmp.eq.s32.totalorder %s17, 3
      %p86 = por %p84, %p85
      %p87 = scmp.ne.s32.totalorder %s79, %s82
      %p88 = scmp.eq.s32.totalorder %s17, 0
      %p89 = por %p87, %p88
      %p90 = scmp.ne.s32.totalorder %s79, %s82
      %p91 = scmp.eq.s32.totalorder %s22, 3
      %p92 = por %p90, %p91
      %p93 = scmp.ne.s32.totalorder %s82, %s83
      %p94 = scmp.eq.s32.totalorder %s22, 0
      %p95 = por %p93, %p94
      %p96 = scmp.ne.s32.totalorder %s82, %s83
      %p97 = scmp.eq.s32.totalorder %s23, 3
      %p98 = por %p96, %p97
      %p100 = scmp.ne.s32.totalorder %s83, %s99
      %p101 = scmp.eq.s32.totalorder %s23, 0
      %p102 = por %p100, %p101
      %p103 = scmp.le.s32.totalorder 1, %s17
      %p104 = scmp.lt.s32.totalorder %s17, 5
      %p105 = pnand %p103, %p104
      %p106 = pneg %p105
      // Predicated region
      $region9: #{tpu_custom_call.1} parent=5 // pred_check
        _
      $region10: #{tpu_custom_call.1} parent=5 // pred_check_branch
        %108 = sbr.rel (%p105) target = $region12
      $region11: #{tpu_custom_call.1} parent=5 // pred_region
        %s109 = ssub.s32 %s17, 1
      $region12: #{tpu_custom_call.1} parent=5 // pred_fallthru
        _
      %p110 = scmp.lt.s32.totalorder %s17, 4
      // Predicated region
      $region13: #{tpu_custom_call.1} parent=5 // pred_check
        %p111 = pneg %p110
      $region14: #{tpu_custom_call.1} parent=5 // pred_check_branch
        %113 = sbr.rel (%p111) target = $region16
      $region15: #{tpu_custom_call.1} parent=5 // pred_region
        // Predicated region
        $region17: #{tpu_custom_call.1} parent=15 // pred_check
          %p114 = pneg %p37
        $region18: #{tpu_custom_call.1} parent=15 // pred_check_branch
          %116 = sbr.rel (%p114) target = $region20
        $region19: #{tpu_custom_call.1} parent=15 // pred_region
          %s117 = sand.u32 %s27, 1
          %s118 = scalar_lea.sflag [#allocation3], %s117
          %s119 = sand.u32 %s27, 1
          %s120 = smul.addr %s119, 2048
          %s121 = scalar_lea.vmem [#allocation2], %s120
          %s122 = smul.u32 8, %s17
          %s124 = ssub.s32 32768, 32768
          %125 = vsyncadd %s118, %s124
          %s126 = smul.addr %s122, 32
          %s127 = smul.addr %s126, 128
          %s128 = scalar_lea.hbm %s0, %s127
          %s129 = sshll.u32 %s121, 4
          %s130 = int_to_ptr.vmem [resolvable:$true] %s129
          %135 = dma.hbm_to_vmem [thread:$0]  %s128, 32768, %s130, %s118, 4096, 4096, 256
        $region20: #{tpu_custom_call.1} parent=15 // pred_fallthru
          _
        // Predicated region
        $region21: #{tpu_custom_call.1} parent=15 // pred_check
          %p136 = pneg %p63
        $region22: #{tpu_custom_call.1} parent=15 // pred_check_branch
          %138 = sbr.rel (%p136) target = $region24
        $region23: #{tpu_custom_call.1} parent=15 // pred_region
          %s139 = sand.u32 %s53, 1
          %s140 = scalar_lea.sflag [#allocation6], %s139
          %s141 = sand.u32 %s53, 1
          %s142 = smul.addr %s141, 2048
          %s143 = scalar_lea.vmem [#allocation5], %s142
          %s144 = smul.u32 8, %s17
          %s146 = ssub.s32 32768, 32768
          %147 = vsyncadd %s140, %s146
          %s148 = smul.addr %s144, 32
          %s149 = smul.addr %s148, 128
          %s150 = scalar_lea.hbm %s1, %s149
          %s151 = sshll.u32 %s143, 4
          %s152 = int_to_ptr.vmem [resolvable:$true] %s151
          %157 = dma.hbm_to_vmem [thread:$0]  %s150, 32768, %s152, %s140, 4096, 4096, 256
        $region24: #{tpu_custom_call.1} parent=15 // pred_fallthru
          _
      $region16: #{tpu_custom_call.1} parent=5 // pred_fallthru
        _
      %p158 = scmp.le.s32.totalorder 1, %s17
      %p159 = scmp.lt.s32.totalorder %s17, 5
      %p160 = pnand %p158, %p159
      %p161 = pneg %p160
      // Predicated region
      $region25: #{tpu_custom_call.1} parent=5 // pred_check
        _
      $region26: #{tpu_custom_call.1} parent=5 // pred_check_branch
        %163 = sbr.rel (%p160) target = $region28
      $region27: #{tpu_custom_call.1} parent=5 // pred_region
        %s164 = ssub.s32 %s17, 1
        %s165 = sand.u32 %s30, 1
        %s166 = scalar_lea.sflag [#allocation3], %s165
        %s167 = sand.u32 %s30, 1
        %s168 = smul.addr %s167, 2048
        %s169 = scalar_lea.vmem [#allocation2], %s168
        // Predicated region
        $region29: #{tpu_custom_call.1} parent=27 // pred_check
          %p170 = pneg %p43
        $region30: #{tpu_custom_call.1} parent=27 // pred_check_branch
          %172 = sbr.rel (%p170) target = $region32
        $region31: #{tpu_custom_call.1} parent=27 // pred_region
          %173 = dma.done %s166, 32768
        $region32: #{tpu_custom_call.1} parent=27 // pred_fallthru
          _
        %s174 = sand.u32 %s56, 1
        %s175 = scalar_lea.sflag [#allocation6], %s174
        %s176 = sand.u32 %s56, 1
        %s177 = smul.addr %s176, 2048
        %s178 = scalar_lea.vmem [#allocation5], %s177
        // Predicated region
        $region33: #{tpu_custom_call.1} parent=27 // pred_check
          %p179 = pneg %p69
        $region34: #{tpu_custom_call.1} parent=27 // pred_check_branch
          %181 = sbr.rel (%p179) target = $region36
        $region35: #{tpu_custom_call.1} parent=27 // pred_region
          %182 = dma.done %s175, 32768
        $region36: #{tpu_custom_call.1} parent=27 // pred_fallthru
          _
        %s183 = sand.u32 %s30, 1
        %s184 = scalar_lea.sflag [#allocation3], %s183
        %s185 = sand.u32 %s30, 1
        %s186 = smul.addr %s185, 2048
        %s187 = scalar_lea.vmem [#allocation2], %s186
        %p188 = pneg %p43
        %p189 = pneg %p40
        %s190 = sand.u32 %s56, 1
        %s191 = scalar_lea.sflag [#allocation6], %s190
        %s192 = sand.u32 %s56, 1
        %s193 = smul.addr %s192, 2048
        %s194 = scalar_lea.vmem [#allocation5], %s193
        %p195 = pneg %p69
        %p196 = pneg %p66
        %p197 = pneg %p95
        %p198 = pneg %p92
        %s199 = sand.u32 %s82, 1
        %s200 = scalar_lea.sflag [#allocation4], %s199
        %s201 = sand.u32 %s82, 1
        %s202 = smul.addr %s201, 2048
        %s203 = scalar_lea.vmem [#allocation7], %s202
        %s204 = smul.u32 8, %s22
        %s205 = smul.u32 8, %s22
        %s206 = smul.u32 8, %s22
        %v207 = vld [vmem:[%s169] sm:$0xff]
        %v208 = vld [vmem:[%s169 + $0x8] sm:$0xff]
        %v209 = vld [vmem:[%s169 + $0x10] sm:$0xff]
        %v210 = vld [vmem:[%s169 + $0x18] sm:$0xff]
        %v211 = vld [vmem:[%s169 + $0x20] sm:$0xff]
        %v212 = vld [vmem:[%s169 + $0x28] sm:$0xff]
        %v213 = vld [vmem:[%s169 + $0x30] sm:$0xff]
        %v214 = vld [vmem:[%s169 + $0x38] sm:$0xff]
        %v215 = vld [vmem:[%s169 + $0x40] sm:$0xff]
        %v216 = vld [vmem:[%s169 + $0x48] sm:$0xff]
        %v217 = vld [vmem:[%s169 + $0x50] sm:$0xff]
        %v218 = vld [vmem:[%s169 + $0x58] sm:$0xff]
        %v219 = vld [vmem:[%s169 + $0x60] sm:$0xff]
        %v220 = vld [vmem:[%s169 + $0x68] sm:$0xff]
        %v221 = vld [vmem:[%s169 + $0x70] sm:$0xff]
        %v222 = vld [vmem:[%s169 + $0x78] sm:$0xff]
        %v223 = vld [vmem:[%s169 + $0x80] sm:$0xff]
        %v224 = vld [vmem:[%s169 + $0x88] sm:$0xff]
        %v225 = vld [vmem:[%s169 + $0x90] sm:$0xff]
        %v226 = vld [vmem:[%s169 + $0x98] sm:$0xff]
        %v227 = vld [vmem:[%s169 + $0xa0] sm:$0xff]
        %v228 = vld [vmem:[%s169 + $0xa8] sm:$0xff]
        %v229 = vld [vmem:[%s169 + $0xb0] sm:$0xff]
        %v230 = vld [vmem:[%s169 + $0xb8] sm:$0xff]
        %v231 = vld [vmem:[%s169 + $0xc0] sm:$0xff]
        %v232 = vld [vmem:[%s169 + $0xc8] sm:$0xff]
        %v233 = vld [vmem:[%s169 + $0xd0] sm:$0xff]
        %v234 = vld [vmem:[%s169 + $0xd8] sm:$0xff]
        %v235 = vld [vmem:[%s169 + $0xe0] sm:$0xff]
        %v236 = vld [vmem:[%s169 + $0xe8] sm:$0xff]
        %v237 = vld [vmem:[%s169 + $0xf0] sm:$0xff]
        %v238 = vld [vmem:[%s169 + $0xf8] sm:$0xff]
        %v239 = vld [vmem:[%s169 + $0x100] sm:$0xff]
        %v240 = vld [vmem:[%s169 + $0x108] sm:$0xff]
        %v241 = vld [vmem:[%s169 + $0x110] sm:$0xff]
        %v242 = vld [vmem:[%s169 + $0x118] sm:$0xff]
        %v243 = vld [vmem:[%s169 + $0x120] sm:$0xff]
        %v244 = vld [vmem:[%s169 + $0x128] sm:$0xff]
        %v245 = vld [vmem:[%s169 + $0x130] sm:$0xff]
        %v246 = vld [vmem:[%s169 + $0x138] sm:$0xff]
        %v247 = vld [vmem:[%s169 + $0x140] sm:$0xff]
        %v248 = vld [vmem:[%s169 + $0x148] sm:$0xff]
        %v249 = vld [vmem:[%s169 + $0x150] sm:$0xff]
        %v250 = vld [vmem:[%s169 + $0x158] sm:$0xff]
        %v251 = vld [vmem:[%s169 + $0x160] sm:$0xff]
        %v252 = vld [vmem:[%s169 + $0x168] sm:$0xff]
        %v253 = vld [vmem:[%s169 + $0x170] sm:$0xff]
        %v254 = vld [vmem:[%s169 + $0x178] sm:$0xff]
        %v255 = vld [vmem:[%s169 + $0x180] sm:$0xff]
        %v256 = vld [vmem:[%s169 + $0x188] sm:$0xff]
        %v257 = vld [vmem:[%s169 + $0x190] sm:$0xff]
        %v258 = vld [vmem:[%s169 + $0x198] sm:$0xff]
        %v259 = vld [vmem:[%s169 + $0x1a0] sm:$0xff]
        %v260 = vld [vmem:[%s169 + $0x1a8] sm:$0xff]
        %v261 = vld [vmem:[%s169 + $0x1b0] sm:$0xff]
        %v262 = vld [vmem:[%s169 + $0x1b8] sm:$0xff]
        %v263 = vld [vmem:[%s169 + $0x1c0] sm:$0xff]
        %v264 = vld [vmem:[%s169 + $0x1c8] sm:$0xff]
        %v265 = vld [vmem:[%s169 + $0x1d0] sm:$0xff]
        %v266 = vld [vmem:[%s169 + $0x1d8] sm:$0xff]
        %v267 = vld [vmem:[%s169 + $0x1e0] sm:$0xff]
        %v268 = vld [vmem:[%s169 + $0x1e8] sm:$0xff]
        %v269 = vld [vmem:[%s169 + $0x1f0] sm:$0xff]
        %v270 = vld [vmem:[%s169 + $0x1f8] sm:$0xff]
        %v271 = vld [vmem:[%s169 + $0x200] sm:$0xff]
        %v272 = vld [vmem:[%s169 + $0x208] sm:$0xff]
        %v273 = vld [vmem:[%s169 + $0x210] sm:$0xff]
        %v274 = vld [vmem:[%s169 + $0x218] sm:$0xff]
        %v275 = vld [vmem:[%s169 + $0x220] sm:$0xff]
        %v276 = vld [vmem:[%s169 + $0x228] sm:$0xff]
        %v277 = vld [vmem:[%s169 + $0x230] sm:$0xff]
        %v278 = vld [vmem:[%s169 + $0x238] sm:$0xff]
        %v279 = vld [vmem:[%s169 + $0x240] sm:$0xff]
        %v280 = vld [vmem:[%s169 + $0x248] sm:$0xff]
        %v281 = vld [vmem:[%s169 + $0x250] sm:$0xff]
        %v282 = vld [vmem:[%s169 + $0x258] sm:$0xff]
        %v283 = vld [vmem:[%s169 + $0x260] sm:$0xff]
        %v284 = vld [vmem:[%s169 + $0x268] sm:$0xff]
        %v285 = vld [vmem:[%s169 + $0x270] sm:$0xff]
        %v286 = vld [vmem:[%s169 + $0x278] sm:$0xff]
        %v287 = vld [vmem:[%s169 + $0x280] sm:$0xff]
        %v288 = vld [vmem:[%s169 + $0x288] sm:$0xff]
        %v289 = vld [vmem:[%s169 + $0x290] sm:$0xff]
        %v290 = vld [vmem:[%s169 + $0x298] sm:$0xff]
        %v291 = vld [vmem:[%s169 + $0x2a0] sm:$0xff]
        %v292 = vld [vmem:[%s169 + $0x2a8] sm:$0xff]
        %v293 = vld [vmem:[%s169 + $0x2b0] sm:$0xff]
        %v294 = vld [vmem:[%s169 + $0x2b8] sm:$0xff]
        %v295 = vld [vmem:[%s169 + $0x2c0] sm:$0xff]
        %v296 = vld [vmem:[%s169 + $0x2c8] sm:$0xff]
        %v297 = vld [vmem:[%s169 + $0x2d0] sm:$0xff]
        %v298 = vld [vmem:[%s169 + $0x2d8] sm:$0xff]
        %v299 = vld [vmem:[%s169 + $0x2e0] sm:$0xff]
        %v300 = vld [vmem:[%s169 + $0x2e8] sm:$0xff]
        %v301 = vld [vmem:[%s169 + $0x2f0] sm:$0xff]
        %v302 = vld [vmem:[%s169 + $0x2f8] sm:$0xff]
        %v303 = vld [vmem:[%s169 + $0x300] sm:$0xff]
        %v304 = vld [vmem:[%s169 + $0x308] sm:$0xff]
        %v305 = vld [vmem:[%s169 + $0x310] sm:$0xff]
        %v306 = vld [vmem:[%s169 + $0x318] sm:$0xff]
        %v307 = vld [vmem:[%s169 + $0x320] sm:$0xff]
        %v308 = vld [vmem:[%s169 + $0x328] sm:$0xff]
        %v309 = vld [vmem:[%s169 + $0x330] sm:$0xff]
        %v310 = vld [vmem:[%s169 + $0x338] sm:$0xff]
        %v311 = vld [vmem:[%s169 + $0x340] sm:$0xff]
        %v312 = vld [vmem:[%s169 + $0x348] sm:$0xff]
        %v313 = vld [vmem:[%s169 + $0x350] sm:$0xff]
        %v314 = vld [vmem:[%s169 + $0x358] sm:$0xff]
        %v315 = vld [vmem:[%s169 + $0x360] sm:$0xff]
        %v316 = vld [vmem:[%s169 + $0x368] sm:$0xff]
        %v317 = vld [vmem:[%s169 + $0x370] sm:$0xff]
        %v318 = vld [vmem:[%s169 + $0x378] sm:$0xff]
        %v319 = vld [vmem:[%s169 + $0x380] sm:$0xff]
        %v320 = vld [vmem:[%s169 + $0x388] sm:$0xff]
        %v321 = vld [vmem:[%s169 + $0x390] sm:$0xff]
        %v322 = vld [vmem:[%s169 + $0x398] sm:$0xff]
        %v323 = vld [vmem:[%s169 + $0x3a0] sm:$0xff]
        %v324 = vld [vmem:[%s169 + $0x3a8] sm:$0xff]
        %v325 = vld [vmem:[%s169 + $0x3b0] sm:$0xff]
        %v326 = vld [vmem:[%s169 + $0x3b8] sm:$0xff]
        %v327 = vld [vmem:[%s169 + $0x3c0] sm:$0xff]
        %v328 = vld [vmem:[%s169 + $0x3c8] sm:$0xff]
        %v329 = vld [vmem:[%s169 + $0x3d0] sm:$0xff]
        %v330 = vld [vmem:[%s169 + $0x3d8] sm:$0xff]
        %v331 = vld [vmem:[%s169 + $0x3e0] sm:$0xff]
        %v332 = vld [vmem:[%s169 + $0x3e8] sm:$0xff]
        %v333 = vld [vmem:[%s169 + $0x3f0] sm:$0xff]
        %v334 = vld [vmem:[%s169 + $0x3f8] sm:$0xff]
        %v335 = vld [vmem:[%s169 + $0x400] sm:$0xff]
        %v336 = vld [vmem:[%s169 + $0x408] sm:$0xff]
        %v337 = vld [vmem:[%s169 + $0x410] sm:$0xff]
        %v338 = vld [vmem:[%s169 + $0x418] sm:$0xff]
        %v339 = vld [vmem:[%s169 + $0x420] sm:$0xff]
        %v340 = vld [vmem:[%s169 + $0x428] sm:$0xff]
        %v341 = vld [vmem:[%s169 + $0x430] sm:$0xff]
        %v342 = vld [vmem:[%s169 + $0x438] sm:$0xff]
        %v343 = vld [vmem:[%s169 + $0x440] sm:$0xff]
        %v344 = vld [vmem:[%s169 + $0x448] sm:$0xff]
        %v345 = vld [vmem:[%s169 + $0x450] sm:$0xff]
        %v346 = vld [vmem:[%s169 + $0x458] sm:$0xff]
        %v347 = vld [vmem:[%s169 + $0x460] sm:$0xff]
        %v348 = vld [vmem:[%s169 + $0x468] sm:$0xff]
        %v349 = vld [vmem:[%s169 + $0x470] sm:$0xff]
        %v350 = vld [vmem:[%s169 + $0x478] sm:$0xff]
        %v351 = vld [vmem:[%s169 + $0x480] sm:$0xff]
        %v352 = vld [vmem:[%s169 + $0x488] sm:$0xff]
        %v353 = vld [vmem:[%s169 + $0x490] sm:$0xff]
        %v354 = vld [vmem:[%s169 + $0x498] sm:$0xff]
        %v355 = vld [vmem:[%s169 + $0x4a0] sm:$0xff]
        %v356 = vld [vmem:[%s169 + $0x4a8] sm:$0xff]
        %v357 = vld [vmem:[%s169 + $0x4b0] sm:$0xff]
        %v358 = vld [vmem:[%s169 + $0x4b8] sm:$0xff]
        %v359 = vld [vmem:[%s169 + $0x4c0] sm:$0xff]
        %v360 = vld [vmem:[%s169 + $0x4c8] sm:$0xff]
        %v361 = vld [vmem:[%s169 + $0x4d0] sm:$0xff]
        %v362 = vld [vmem:[%s169 + $0x4d8] sm:$0xff]
        %v363 = vld [vmem:[%s169 + $0x4e0] sm:$0xff]
        %v364 = vld [vmem:[%s169 + $0x4e8] sm:$0xff]
        %v365 = vld [vmem:[%s169 + $0x4f0] sm:$0xff]
        %v366 = vld [vmem:[%s169 + $0x4f8] sm:$0xff]
        %v367 = vld [vmem:[%s169 + $0x500] sm:$0xff]
        %v368 = vld [vmem:[%s169 + $0x508] sm:$0xff]
        %v369 = vld [vmem:[%s169 + $0x510] sm:$0xff]
        %v370 = vld [vmem:[%s169 + $0x518] sm:$0xff]
        %v371 = vld [vmem:[%s169 + $0x520] sm:$0xff]
        %v372 = vld [vmem:[%s169 + $0x528] sm:$0xff]
        %v373 = vld [vmem:[%s169 + $0x530] sm:$0xff]
        %v374 = vld [vmem:[%s169 + $0x538] sm:$0xff]
        %v375 = vld [vmem:[%s169 + $0x540] sm:$0xff]
        %v376 = vld [vmem:[%s169 + $0x548] sm:$0xff]
        %v377 = vld [vmem:[%s169 + $0x550] sm:$0xff]
        %v378 = vld [vmem:[%s169 + $0x558] sm:$0xff]
        %v379 = vld [vmem:[%s169 + $0x560] sm:$0xff]
        %v380 = vld [vmem:[%s169 + $0x568] sm:$0xff]
        %v381 = vld [vmem:[%s169 + $0x570] sm:$0xff]
        %v382 = vld [vmem:[%s169 + $0x578] sm:$0xff]
        %v383 = vld [vmem:[%s169 + $0x580] sm:$0xff]
        %v384 = vld [vmem:[%s169 + $0x588] sm:$0xff]
        %v385 = vld [vmem:[%s169 + $0x590] sm:$0xff]
        %v386 = vld [vmem:[%s169 + $0x598] sm:$0xff]
        %v387 = vld [vmem:[%s169 + $0x5a0] sm:$0xff]
        %v388 = vld [vmem:[%s169 + $0x5a8] sm:$0xff]
        %v389 = vld [vmem:[%s169 + $0x5b0] sm:$0xff]
        %v390 = vld [vmem:[%s169 + $0x5b8] sm:$0xff]
        %v391 = vld [vmem:[%s169 + $0x5c0] sm:$0xff]
        %v392 = vld [vmem:[%s169 + $0x5c8] sm:$0xff]
        %v393 = vld [vmem:[%s169 + $0x5d0] sm:$0xff]
        %v394 = vld [vmem:[%s169 + $0x5d8] sm:$0xff]
        %v395 = vld [vmem:[%s169 + $0x5e0] sm:$0xff]
        %v396 = vld [vmem:[%s169 + $0x5e8] sm:$0xff]
        %v397 = vld [vmem:[%s169 + $0x5f0] sm:$0xff]
        %v398 = vld [vmem:[%s169 + $0x5f8] sm:$0xff]
        %v399 = vld [vmem:[%s169 + $0x600] sm:$0xff]
        %v400 = vld [vmem:[%s169 + $0x608] sm:$0xff]
        %v401 = vld [vmem:[%s169 + $0x610] sm:$0xff]
        %v402 = vld [vmem:[%s169 + $0x618] sm:$0xff]
        %v403 = vld [vmem:[%s169 + $0x620] sm:$0xff]
        %v404 = vld [vmem:[%s169 + $0x628] sm:$0xff]
        %v405 = vld [vmem:[%s169 + $0x630] sm:$0xff]
        %v406 = vld [vmem:[%s169 + $0x638] sm:$0xff]
        %v407 = vld [vmem:[%s169 + $0x640] sm:$0xff]
        %v408 = vld [vmem:[%s169 + $0x648] sm:$0xff]
        %v409 = vld [vmem:[%s169 + $0x650] sm:$0xff]
        %v410 = vld [vmem:[%s169 + $0x658] sm:$0xff]
        %v411 = vld [vmem:[%s169 + $0x660] sm:$0xff]
        %v412 = vld [vmem:[%s169 + $0x668] sm:$0xff]
        %v413 = vld [vmem:[%s169 + $0x670] sm:$0xff]
        %v414 = vld [vmem:[%s169 + $0x678] sm:$0xff]
        %v415 = vld [vmem:[%s169 + $0x680] sm:$0xff]
        %v416 = vld [vmem:[%s169 + $0x688] sm:$0xff]
        %v417 = vld [vmem:[%s169 + $0x690] sm:$0xff]
        %v418 = vld [vmem:[%s169 + $0x698] sm:$0xff]
        %v419 = vld [vmem:[%s169 + $0x6a0] sm:$0xff]
        %v420 = vld [vmem:[%s169 + $0x6a8] sm:$0xff]
        %v421 = vld [vmem:[%s169 + $0x6b0] sm:$0xff]
        %v422 = vld [vmem:[%s169 + $0x6b8] sm:$0xff]
        %v423 = vld [vmem:[%s169 + $0x6c0] sm:$0xff]
        %v424 = vld [vmem:[%s169 + $0x6c8] sm:$0xff]
        %v425 = vld [vmem:[%s169 + $0x6d0] sm:$0xff]
        %v426 = vld [vmem:[%s169 + $0x6d8] sm:$0xff]
        %v427 = vld [vmem:[%s169 + $0x6e0] sm:$0xff]
        %v428 = vld [vmem:[%s169 + $0x6e8] sm:$0xff]
        %v429 = vld [vmem:[%s169 + $0x6f0] sm:$0xff]
        %v430 = vld [vmem:[%s169 + $0x6f8] sm:$0xff]
        %v431 = vld [vmem:[%s169 + $0x700] sm:$0xff]
        %v432 = vld [vmem:[%s169 + $0x708] sm:$0xff]
        %v433 = vld [vmem:[%s169 + $0x710] sm:$0xff]
        %v434 = vld [vmem:[%s169 + $0x718] sm:$0xff]
        %v435 = vld [vmem:[%s169 + $0x720] sm:$0xff]
        %v436 = vld [vmem:[%s169 + $0x728] sm:$0xff]
        %v437 = vld [vmem:[%s169 + $0x730] sm:$0xff]
        %v438 = vld [vmem:[%s169 + $0x738] sm:$0xff]
        %v439 = vld [vmem:[%s169 + $0x740] sm:$0xff]
        %v440 = vld [vmem:[%s169 + $0x748] sm:$0xff]
        %v441 = vld [vmem:[%s169 + $0x750] sm:$0xff]
        %v442 = vld [vmem:[%s169 + $0x758] sm:$0xff]
        %v443 = vld [vmem:[%s169 + $0x760] sm:$0xff]
        %v444 = vld [vmem:[%s169 + $0x768] sm:$0xff]
        %v445 = vld [vmem:[%s169 + $0x770] sm:$0xff]
        %v446 = vld [vmem:[%s169 + $0x778] sm:$0xff]
        %v447 = vld [vmem:[%s169 + $0x780] sm:$0xff]
        %v448 = vld [vmem:[%s169 + $0x788] sm:$0xff]
        %v449 = vld [vmem:[%s169 + $0x790] sm:$0xff]
        %v450 = vld [vmem:[%s169 + $0x798] sm:$0xff]
        %v451 = vld [vmem:[%s169 + $0x7a0] sm:$0xff]
        %v452 = vld [vmem:[%s169 + $0x7a8] sm:$0xff]
        %v453 = vld [vmem:[%s169 + $0x7b0] sm:$0xff]
        %v454 = vld [vmem:[%s169 + $0x7b8] sm:$0xff]
        %v455 = vld [vmem:[%s169 + $0x7c0] sm:$0xff]
        %v456 = vld [vmem:[%s169 + $0x7c8] sm:$0xff]
        %v457 = vld [vmem:[%s169 + $0x7d0] sm:$0xff]
        %v458 = vld [vmem:[%s169 + $0x7d8] sm:$0xff]
        %v459 = vld [vmem:[%s169 + $0x7e0] sm:$0xff]
        %v460 = vld [vmem:[%s169 + $0x7e8] sm:$0xff]
        %v461 = vld [vmem:[%s169 + $0x7f0] sm:$0xff]
        %v462 = vld [vmem:[%s169 + $0x7f8] sm:$0xff]
        %v463 = vld [vmem:[%s178] sm:$0xff]
        %v464 = vld [vmem:[%s178 + $0x8] sm:$0xff]
        %v465 = vld [vmem:[%s178 + $0x10] sm:$0xff]
        %v466 = vld [vmem:[%s178 + $0x18] sm:$0xff]
        %v467 = vld [vmem:[%s178 + $0x20] sm:$0xff]
        %v468 = vld [vmem:[%s178 + $0x28] sm:$0xff]
        %v469 = vld [vmem:[%s178 + $0x30] sm:$0xff]
        %v470 = vld [vmem:[%s178 + $0x38] sm:$0xff]
        %v471 = vld [vmem:[%s178 + $0x40] sm:$0xff]
        %v472 = vld [vmem:[%s178 + $0x48] sm:$0xff]
        %v473 = vld [vmem:[%s178 + $0x50] sm:$0xff]
        %v474 = vld [vmem:[%s178 + $0x58] sm:$0xff]
        %v475 = vld [vmem:[%s178 + $0x60] sm:$0xff]
        %v476 = vld [vmem:[%s178 + $0x68] sm:$0xff]
        %v477 = vld [vmem:[%s178 + $0x70] sm:$0xff]
        %v478 = vld [vmem:[%s178 + $0x78] sm:$0xff]
        %v479 = vld [vmem:[%s178 + $0x80] sm:$0xff]
        %v480 = vld [vmem:[%s178 + $0x88] sm:$0xff]
        %v481 = vld [vmem:[%s178 + $0x90] sm:$0xff]
        %v482 = vld [vmem:[%s178 + $0x98] sm:$0xff]
        %v483 = vld [vmem:[%s178 + $0xa0] sm:$0xff]
        %v484 = vld [vmem:[%s178 + $0xa8] sm:$0xff]
        %v485 = vld [vmem:[%s178 + $0xb0] sm:$0xff]
        %v486 = vld [vmem:[%s178 + $0xb8] sm:$0xff]
        %v487 = vld [vmem:[%s178 + $0xc0] sm:$0xff]
        %v488 = vld [vmem:[%s178 + $0xc8] sm:$0xff]
        %v489 = vld [vmem:[%s178 + $0xd0] sm:$0xff]
        %v490 = vld [vmem:[%s178 + $0xd8] sm:$0xff]
        %v491 = vld [vmem:[%s178 + $0xe0] sm:$0xff]
        %v492 = vld [vmem:[%s178 + $0xe8] sm:$0xff]
        %v493 = vld [vmem:[%s178 + $0xf0] sm:$0xff]
        %v494 = vld [vmem:[%s178 + $0xf8] sm:$0xff]
        %v495 = vld [vmem:[%s178 + $0x100] sm:$0xff]
        %v496 = vld [vmem:[%s178 + $0x108] sm:$0xff]
        %v497 = vld [vmem:[%s178 + $0x110] sm:$0xff]
        %v498 = vld [vmem:[%s178 + $0x118] sm:$0xff]
        %v499 = vld [vmem:[%s178 + $0x120] sm:$0xff]
        %v500 = vld [vmem:[%s178 + $0x128] sm:$0xff]
        %v501 = vld [vmem:[%s178 + $0x130] sm:$0xff]
        %v502 = vld [vmem:[%s178 + $0x138] sm:$0xff]
        %v503 = vld [vmem:[%s178 + $0x140] sm:$0xff]
        %v504 = vld [vmem:[%s178 + $0x148] sm:$0xff]
        %v505 = vld [vmem:[%s178 + $0x150] sm:$0xff]
        %v506 = vld [vmem:[%s178 + $0x158] sm:$0xff]
        %v507 = vld [vmem:[%s178 + $0x160] sm:$0xff]
        %v508 = vld [vmem:[%s178 + $0x168] sm:$0xff]
        %v509 = vld [vmem:[%s178 + $0x170] sm:$0xff]
        %v510 = vld [vmem:[%s178 + $0x178] sm:$0xff]
        %v511 = vld [vmem:[%s178 + $0x180] sm:$0xff]
        %v512 = vld [vmem:[%s178 + $0x188] sm:$0xff]
        %v513 = vld [vmem:[%s178 + $0x190] sm:$0xff]
        %v514 = vld [vmem:[%s178 + $0x198] sm:$0xff]
        %v515 = vld [vmem:[%s178 + $0x1a0] sm:$0xff]
        %v516 = vld [vmem:[%s178 + $0x1a8] sm:$0xff]
        %v517 = vld [vmem:[%s178 + $0x1b0] sm:$0xff]
        %v518 = vld [vmem:[%s178 + $0x1b8] sm:$0xff]
        %v519 = vld [vmem:[%s178 + $0x1c0] sm:$0xff]
        %v520 = vld [vmem:[%s178 + $0x1c8] sm:$0xff]
        %v521 = vld [vmem:[%s178 + $0x1d0] sm:$0xff]
        %v522 = vld [vmem:[%s178 + $0x1d8] sm:$0xff]
        %v523 = vld [vmem:[%s178 + $0x1e0] sm:$0xff]
        %v524 = vld [vmem:[%s178 + $0x1e8] sm:$0xff]
        %v525 = vld [vmem:[%s178 + $0x1f0] sm:$0xff]
        %v526 = vld [vmem:[%s178 + $0x1f8] sm:$0xff]
        %v527 = vld [vmem:[%s178 + $0x200] sm:$0xff]
        %v528 = vld [vmem:[%s178 + $0x208] sm:$0xff]
        %v529 = vld [vmem:[%s178 + $0x210] sm:$0xff]
        %v530 = vld [vmem:[%s178 + $0x218] sm:$0xff]
        %v531 = vld [vmem:[%s178 + $0x220] sm:$0xff]
        %v532 = vld [vmem:[%s178 + $0x228] sm:$0xff]
        %v533 = vld [vmem:[%s178 + $0x230] sm:$0xff]
        %v534 = vld [vmem:[%s178 + $0x238] sm:$0xff]
        %v535 = vld [vmem:[%s178 + $0x240] sm:$0xff]
        %v536 = vld [vmem:[%s178 + $0x248] sm:$0xff]
        %v537 = vld [vmem:[%s178 + $0x250] sm:$0xff]
        %v538 = vld [vmem:[%s178 + $0x258] sm:$0xff]
        %v539 = vld [vmem:[%s178 + $0x260] sm:$0xff]
        %v540 = vld [vmem:[%s178 + $0x268] sm:$0xff]
        %v541 = vld [vmem:[%s178 + $0x270] sm:$0xff]
        %v542 = vld [vmem:[%s178 + $0x278] sm:$0xff]
        %v543 = vld [vmem:[%s178 + $0x280] sm:$0xff]
        %v544 = vld [vmem:[%s178 + $0x288] sm:$0xff]
        %v545 = vld [vmem:[%s178 + $0x290] sm:$0xff]
        %v546 = vld [vmem:[%s178 + $0x298] sm:$0xff]
        %v547 = vld [vmem:[%s178 + $0x2a0] sm:$0xff]
        %v548 = vld [vmem:[%s178 + $0x2a8] sm:$0xff]
        %v549 = vld [vmem:[%s178 + $0x2b0] sm:$0xff]
        %v550 = vld [vmem:[%s178 + $0x2b8] sm:$0xff]
        %v551 = vld [vmem:[%s178 + $0x2c0] sm:$0xff]
        %v552 = vld [vmem:[%s178 + $0x2c8] sm:$0xff]
        %v553 = vld [vmem:[%s178 + $0x2d0] sm:$0xff]
        %v554 = vld [vmem:[%s178 + $0x2d8] sm:$0xff]
        %v555 = vld [vmem:[%s178 + $0x2e0] sm:$0xff]
        %v556 = vld [vmem:[%s178 + $0x2e8] sm:$0xff]
        %v557 = vld [vmem:[%s178 + $0x2f0] sm:$0xff]
        %v558 = vld [vmem:[%s178 + $0x2f8] sm:$0xff]
        %v559 = vld [vmem:[%s178 + $0x300] sm:$0xff]
        %v560 = vld [vmem:[%s178 + $0x308] sm:$0xff]
        %v561 = vld [vmem:[%s178 + $0x310] sm:$0xff]
        %v562 = vld [vmem:[%s178 + $0x318] sm:$0xff]
        %v563 = vld [vmem:[%s178 + $0x320] sm:$0xff]
        %v564 = vld [vmem:[%s178 + $0x328] sm:$0xff]
        %v565 = vld [vmem:[%s178 + $0x330] sm:$0xff]
        %v566 = vld [vmem:[%s178 + $0x338] sm:$0xff]
        %v567 = vld [vmem:[%s178 + $0x340] sm:$0xff]
        %v568 = vld [vmem:[%s178 + $0x348] sm:$0xff]
        %v569 = vld [vmem:[%s178 + $0x350] sm:$0xff]
        %v570 = vld [vmem:[%s178 + $0x358] sm:$0xff]
        %v571 = vld [vmem:[%s178 + $0x360] sm:$0xff]
        %v572 = vld [vmem:[%s178 + $0x368] sm:$0xff]
        %v573 = vld [vmem:[%s178 + $0x370] sm:$0xff]
        %v574 = vld [vmem:[%s178 + $0x378] sm:$0xff]
        %v575 = vld [vmem:[%s178 + $0x380] sm:$0xff]
        %v576 = vld [vmem:[%s178 + $0x388] sm:$0xff]
        %v577 = vld [vmem:[%s178 + $0x390] sm:$0xff]
        %v578 = vld [vmem:[%s178 + $0x398] sm:$0xff]
        %v579 = vld [vmem:[%s178 + $0x3a0] sm:$0xff]
        %v580 = vld [vmem:[%s178 + $0x3a8] sm:$0xff]
        %v581 = vld [vmem:[%s178 + $0x3b0] sm:$0xff]
        %v582 = vld [vmem:[%s178 + $0x3b8] sm:$0xff]
        %v583 = vld [vmem:[%s178 + $0x3c0] sm:$0xff]
        %v584 = vld [vmem:[%s178 + $0x3c8] sm:$0xff]
        %v585 = vld [vmem:[%s178 + $0x3d0] sm:$0xff]
        %v586 = vld [vmem:[%s178 + $0x3d8] sm:$0xff]
        %v587 = vld [vmem:[%s178 + $0x3e0] sm:$0xff]
        %v588 = vld [vmem:[%s178 + $0x3e8] sm:$0xff]
        %v589 = vld [vmem:[%s178 + $0x3f0] sm:$0xff]
        %v590 = vld [vmem:[%s178 + $0x3f8] sm:$0xff]
        %v591 = vld [vmem:[%s178 + $0x400] sm:$0xff]
        %v592 = vld [vmem:[%s178 + $0x408] sm:$0xff]
        %v593 = vld [vmem:[%s178 + $0x410] sm:$0xff]
        %v594 = vld [vmem:[%s178 + $0x418] sm:$0xff]
        %v595 = vld [vmem:[%s178 + $0x420] sm:$0xff]
        %v596 = vld [vmem:[%s178 + $0x428] sm:$0xff]
        %v597 = vld [vmem:[%s178 + $0x430] sm:$0xff]
        %v598 = vld [vmem:[%s178 + $0x438] sm:$0xff]
        %v599 = vld [vmem:[%s178 + $0x440] sm:$0xff]
        %v600 = vld [vmem:[%s178 + $0x448] sm:$0xff]
        %v601 = vld [vmem:[%s178 + $0x450] sm:$0xff]
        %v602 = vld [vmem:[%s178 + $0x458] sm:$0xff]
        %v603 = vld [vmem:[%s178 + $0x460] sm:$0xff]
        %v604 = vld [vmem:[%s178 + $0x468] sm:$0xff]
        %v605 = vld [vmem:[%s178 + $0x470] sm:$0xff]
        %v606 = vld [vmem:[%s178 + $0x478] sm:$0xff]
        %v607 = vld [vmem:[%s178 + $0x480] sm:$0xff]
        %v608 = vld [vmem:[%s178 + $0x488] sm:$0xff]
        %v609 = vld [vmem:[%s178 + $0x490] sm:$0xff]
        %v610 = vld [vmem:[%s178 + $0x498] sm:$0xff]
        %v611 = vld [vmem:[%s178 + $0x4a0] sm:$0xff]
        %v612 = vld [vmem:[%s178 + $0x4a8] sm:$0xff]
        %v613 = vld [vmem:[%s178 + $0x4b0] sm:$0xff]
        %v614 = vld [vmem:[%s178 + $0x4b8] sm:$0xff]
        %v615 = vld [vmem:[%s178 + $0x4c0] sm:$0xff]
        %v616 = vld [vmem:[%s178 + $0x4c8] sm:$0xff]
        %v617 = vld [vmem:[%s178 + $0x4d0] sm:$0xff]
        %v618 = vld [vmem:[%s178 + $0x4d8] sm:$0xff]
        %v619 = vld [vmem:[%s178 + $0x4e0] sm:$0xff]
        %v620 = vld [vmem:[%s178 + $0x4e8] sm:$0xff]
        %v621 = vld [vmem:[%s178 + $0x4f0] sm:$0xff]
        %v622 = vld [vmem:[%s178 + $0x4f8] sm:$0xff]
        %v623 = vld [vmem:[%s178 + $0x500] sm:$0xff]
        %v624 = vld [vmem:[%s178 + $0x508] sm:$0xff]
        %v625 = vld [vmem:[%s178 + $0x510] sm:$0xff]
        %v626 = vld [vmem:[%s178 + $0x518] sm:$0xff]
        %v627 = vld [vmem:[%s178 + $0x520] sm:$0xff]
        %v628 = vld [vmem:[%s178 + $0x528] sm:$0xff]
        %v629 = vld [vmem:[%s178 + $0x530] sm:$0xff]
        %v630 = vld [vmem:[%s178 + $0x538] sm:$0xff]
        %v631 = vld [vmem:[%s178 + $0x540] sm:$0xff]
        %v632 = vld [vmem:[%s178 + $0x548] sm:$0xff]
        %v633 = vld [vmem:[%s178 + $0x550] sm:$0xff]
        %v634 = vld [vmem:[%s178 + $0x558] sm:$0xff]
        %v635 = vld [vmem:[%s178 + $0x560] sm:$0xff]
        %v636 = vld [vmem:[%s178 + $0x568] sm:$0xff]
        %v637 = vld [vmem:[%s178 + $0x570] sm:$0xff]
        %v638 = vld [vmem:[%s178 + $0x578] sm:$0xff]
        %v639 = vld [vmem:[%s178 + $0x580] sm:$0xff]
        %v640 = vld [vmem:[%s178 + $0x588] sm:$0xff]
        %v641 = vld [vmem:[%s178 + $0x590] sm:$0xff]
        %v642 = vld [vmem:[%s178 + $0x598] sm:$0xff]
        %v643 = vld [vmem:[%s178 + $0x5a0] sm:$0xff]
        %v644 = vld [vmem:[%s178 + $0x5a8] sm:$0xff]
        %v645 = vld [vmem:[%s178 + $0x5b0] sm:$0xff]
        %v646 = vld [vmem:[%s178 + $0x5b8] sm:$0xff]
        %v647 = vld [vmem:[%s178 + $0x5c0] sm:$0xff]
        %v648 = vld [vmem:[%s178 + $0x5c8] sm:$0xff]
        %v649 = vld [vmem:[%s178 + $0x5d0] sm:$0xff]
        %v650 = vld [vmem:[%s178 + $0x5d8] sm:$0xff]
        %v651 = vld [vmem:[%s178 + $0x5e0] sm:$0xff]
        %v652 = vld [vmem:[%s178 + $0x5e8] sm:$0xff]
        %v653 = vld [vmem:[%s178 + $0x5f0] sm:$0xff]
        %v654 = vld [vmem:[%s178 + $0x5f8] sm:$0xff]
        %v655 = vld [vmem:[%s178 + $0x600] sm:$0xff]
        %v656 = vld [vmem:[%s178 + $0x608] sm:$0xff]
        %v657 = vld [vmem:[%s178 + $0x610] sm:$0xff]
        %v658 = vld [vmem:[%s178 + $0x618] sm:$0xff]
        %v659 = vld [vmem:[%s178 + $0x620] sm:$0xff]
        %v660 = vld [vmem:[%s178 + $0x628] sm:$0xff]
        %v661 = vld [vmem:[%s178 + $0x630] sm:$0xff]
        %v662 = vld [vmem:[%s178 + $0x638] sm:$0xff]
        %v663 = vld [vmem:[%s178 + $0x640] sm:$0xff]
        %v664 = vld [vmem:[%s178 + $0x648] sm:$0xff]
        %v665 = vld [vmem:[%s178 + $0x650] sm:$0xff]
        %v666 = vld [vmem:[%s178 + $0x658] sm:$0xff]
        %v667 = vld [vmem:[%s178 + $0x660] sm:$0xff]
        %v668 = vld [vmem:[%s178 + $0x668] sm:$0xff]
        %v669 = vld [vmem:[%s178 + $0x670] sm:$0xff]
        %v670 = vld [vmem:[%s178 + $0x678] sm:$0xff]
        %v671 = vld [vmem:[%s178 + $0x680] sm:$0xff]
        %v672 = vld [vmem:[%s178 + $0x688] sm:$0xff]
        %v673 = vld [vmem:[%s178 + $0x690] sm:$0xff]
        %v674 = vld [vmem:[%s178 + $0x698] sm:$0xff]
        %v675 = vld [vmem:[%s178 + $0x6a0] sm:$0xff]
        %v676 = vld [vmem:[%s178 + $0x6a8] sm:$0xff]
        %v677 = vld [vmem:[%s178 + $0x6b0] sm:$0xff]
        %v678 = vld [vmem:[%s178 + $0x6b8] sm:$0xff]
        %v679 = vld [vmem:[%s178 + $0x6c0] sm:$0xff]
        %v680 = vld [vmem:[%s178 + $0x6c8] sm:$0xff]
        %v681 = vld [vmem:[%s178 + $0x6d0] sm:$0xff]
        %v682 = vld [vmem:[%s178 + $0x6d8] sm:$0xff]
        %v683 = vld [vmem:[%s178 + $0x6e0] sm:$0xff]
        %v684 = vld [vmem:[%s178 + $0x6e8] sm:$0xff]
        %v685 = vld [vmem:[%s178 + $0x6f0] sm:$0xff]
        %v686 = vld [vmem:[%s178 + $0x6f8] sm:$0xff]
        %v687 = vld [vmem:[%s178 + $0x700] sm:$0xff]
        %v688 = vld [vmem:[%s178 + $0x708] sm:$0xff]
        %v689 = vld [vmem:[%s178 + $0x710] sm:$0xff]
        %v690 = vld [vmem:[%s178 + $0x718] sm:$0xff]
        %v691 = vld [vmem:[%s178 + $0x720] sm:$0xff]
        %v692 = vld [vmem:[%s178 + $0x728] sm:$0xff]
        %v693 = vld [vmem:[%s178 + $0x730] sm:$0xff]
        %v694 = vld [vmem:[%s178 + $0x738] sm:$0xff]
        %v695 = vld [vmem:[%s178 + $0x740] sm:$0xff]
        %v696 = vld [vmem:[%s178 + $0x748] sm:$0xff]
        %v697 = vld [vmem:[%s178 + $0x750] sm:$0xff]
        %v698 = vld [vmem:[%s178 + $0x758] sm:$0xff]
        %v699 = vld [vmem:[%s178 + $0x760] sm:$0xff]
        %v700 = vld [vmem:[%s178 + $0x768] sm:$0xff]
        %v701 = vld [vmem:[%s178 + $0x770] sm:$0xff]
        %v702 = vld [vmem:[%s178 + $0x778] sm:$0xff]
        %v703 = vld [vmem:[%s178 + $0x780] sm:$0xff]
        %v704 = vld [vmem:[%s178 + $0x788] sm:$0xff]
        %v705 = vld [vmem:[%s178 + $0x790] sm:$0xff]
        %v706 = vld [vmem:[%s178 + $0x798] sm:$0xff]
        %v707 = vld [vmem:[%s178 + $0x7a0] sm:$0xff]
        %v708 = vld [vmem:[%s178 + $0x7a8] sm:$0xff]
        %v709 = vld [vmem:[%s178 + $0x7b0] sm:$0xff]
        %v710 = vld [vmem:[%s178 + $0x7b8] sm:$0xff]
        %v711 = vld [vmem:[%s178 + $0x7c0] sm:$0xff]
        %v712 = vld [vmem:[%s178 + $0x7c8] sm:$0xff]
        %v713 = vld [vmem:[%s178 + $0x7d0] sm:$0xff]
        %v714 = vld [vmem:[%s178 + $0x7d8] sm:$0xff]
        %v715 = vld [vmem:[%s178 + $0x7e0] sm:$0xff]
        %v716 = vld [vmem:[%s178 + $0x7e8] sm:$0xff]
        %v717 = vld [vmem:[%s178 + $0x7f0] sm:$0xff]
        %v718 = vld [vmem:[%s178 + $0x7f8] sm:$0xff]
        %v719 = vmul.f32 %v207, %v463
        %v720 = vmul.f32 %v208, %v464
        %v721 = vmul.f32 %v209, %v465
        %v722 = vmul.f32 %v210, %v466
        %v723 = vmul.f32 %v211, %v467
        %v724 = vmul.f32 %v212, %v468
        %v725 = vmul.f32 %v213, %v469
        %v726 = vmul.f32 %v214, %v470
        %v727 = vmul.f32 %v215, %v471
        %v728 = vmul.f32 %v216, %v472
        %v729 = vmul.f32 %v217, %v473
        %v730 = vmul.f32 %v218, %v474
        %v731 = vmul.f32 %v219, %v475
        %v732 = vmul.f32 %v220, %v476
        %v733 = vmul.f32 %v221, %v477
        %v734 = vmul.f32 %v222, %v478
        %v735 = vmul.f32 %v223, %v479
        %v736 = vmul.f32 %v224, %v480
        %v737 = vmul.f32 %v225, %v481
        %v738 = vmul.f32 %v226, %v482
        %v739 = vmul.f32 %v227, %v483
        %v740 = vmul.f32 %v228, %v484
        %v741 = vmul.f32 %v229, %v485
        %v742 = vmul.f32 %v230, %v486
        %v743 = vmul.f32 %v231, %v487
        %v744 = vmul.f32 %v232, %v488
        %v745 = vmul.f32 %v233, %v489
        %v746 = vmul.f32 %v234, %v490
        %v747 = vmul.f32 %v235, %v491
        %v748 = vmul.f32 %v236, %v492
        %v749 = vmul.f32 %v237, %v493
        %v750 = vmul.f32 %v238, %v494
        %v751 = vmul.f32 %v239, %v495
        %v752 = vmul.f32 %v240, %v496
        %v753 = vmul.f32 %v241, %v497
        %v754 = vmul.f32 %v242, %v498
        %v755 = vmul.f32 %v243, %v499
        %v756 = vmul.f32 %v244, %v500
        %v757 = vmul.f32 %v245, %v501
        %v758 = vmul.f32 %v246, %v502
        %v759 = vmul.f32 %v247, %v503
        %v760 = vmul.f32 %v248, %v504
        %v761 = vmul.f32 %v249, %v505
        %v762 = vmul.f32 %v250, %v506
        %v763 = vmul.f32 %v251, %v507
        %v764 = vmul.f32 %v252, %v508
        %v765 = vmul.f32 %v253, %v509
        %v766 = vmul.f32 %v254, %v510
        %v767 = vmul.f32 %v255, %v511
        %v768 = vmul.f32 %v256, %v512
        %v769 = vmul.f32 %v257, %v513
        %v770 = vmul.f32 %v258, %v514
        %v771 = vmul.f32 %v259, %v515
        %v772 = vmul.f32 %v260, %v516
        %v773 = vmul.f32 %v261, %v517
        %v774 = vmul.f32 %v262, %v518
        %v775 = vmul.f32 %v263, %v519
        %v776 = vmul.f32 %v264, %v520
        %v777 = vmul.f32 %v265, %v521
        %v778 = vmul.f32 %v266, %v522
        %v779 = vmul.f32 %v267, %v523
        %v780 = vmul.f32 %v268, %v524
        %v781 = vmul.f32 %v269, %v525
        %v782 = vmul.f32 %v270, %v526
        %v783 = vmul.f32 %v271, %v527
        %v784 = vmul.f32 %v272, %v528
        %v785 = vmul.f32 %v273, %v529
        %v786 = vmul.f32 %v274, %v530
        %v787 = vmul.f32 %v275, %v531
        %v788 = vmul.f32 %v276, %v532
        %v789 = vmul.f32 %v277, %v533
        %v790 = vmul.f32 %v278, %v534
        %v791 = vmul.f32 %v279, %v535
        %v792 = vmul.f32 %v280, %v536
        %v793 = vmul.f32 %v281, %v537
        %v794 = vmul.f32 %v282, %v538
        %v795 = vmul.f32 %v283, %v539
        %v796 = vmul.f32 %v284, %v540
        %v797 = vmul.f32 %v285, %v541
        %v798 = vmul.f32 %v286, %v542
        %v799 = vmul.f32 %v287, %v543
        %v800 = vmul.f32 %v288, %v544
        %v801 = vmul.f32 %v289, %v545
        %v802 = vmul.f32 %v290, %v546
        %v803 = vmul.f32 %v291, %v547
        %v804 = vmul.f32 %v292, %v548
        %v805 = vmul.f32 %v293, %v549
        %v806 = vmul.f32 %v294, %v550
        %v807 = vmul.f32 %v295, %v551
        %v808 = vmul.f32 %v296, %v552
        %v809 = vmul.f32 %v297, %v553
        %v810 = vmul.f32 %v298, %v554
        %v811 = vmul.f32 %v299, %v555
        %v812 = vmul.f32 %v300, %v556
        %v813 = vmul.f32 %v301, %v557
        %v814 = vmul.f32 %v302, %v558
        %v815 = vmul.f32 %v303, %v559
        %v816 = vmul.f32 %v304, %v560
        %v817 = vmul.f32 %v305, %v561
        %v818 = vmul.f32 %v306, %v562
        %v819 = vmul.f32 %v307, %v563
        %v820 = vmul.f32 %v308, %v564
        %v821 = vmul.f32 %v309, %v565
        %v822 = vmul.f32 %v310, %v566
        %v823 = vmul.f32 %v311, %v567
        %v824 = vmul.f32 %v312, %v568
        %v825 = vmul.f32 %v313, %v569
        %v826 = vmul.f32 %v314, %v570
        %v827 = vmul.f32 %v315, %v571
        %v828 = vmul.f32 %v316, %v572
        %v829 = vmul.f32 %v317, %v573
        %v830 = vmul.f32 %v318, %v574
        %v831 = vmul.f32 %v319, %v575
        %v832 = vmul.f32 %v320, %v576
        %v833 = vmul.f32 %v321, %v577
        %v834 = vmul.f32 %v322, %v578
        %v835 = vmul.f32 %v323, %v579
        %v836 = vmul.f32 %v324, %v580
        %v837 = vmul.f32 %v325, %v581
        %v838 = vmul.f32 %v326, %v582
        %v839 = vmul.f32 %v327, %v583
        %v840 = vmul.f32 %v328, %v584
        %v841 = vmul.f32 %v329, %v585
        %v842 = vmul.f32 %v330, %v586
        %v843 = vmul.f32 %v331, %v587
        %v844 = vmul.f32 %v332, %v588
        %v845 = vmul.f32 %v333, %v589
        %v846 = vmul.f32 %v334, %v590
        %v847 = vmul.f32 %v335, %v591
        %v848 = vmul.f32 %v336, %v592
        %v849 = vmul.f32 %v337, %v593
        %v850 = vmul.f32 %v338, %v594
        %v851 = vmul.f32 %v339, %v595
        %v852 = vmul.f32 %v340, %v596
        %v853 = vmul.f32 %v341, %v597
        %v854 = vmul.f32 %v342, %v598
        %v855 = vmul.f32 %v343, %v599
        %v856 = vmul.f32 %v344, %v600
        %v857 = vmul.f32 %v345, %v601
        %v858 = vmul.f32 %v346, %v602
        %v859 = vmul.f32 %v347, %v603
        %v860 = vmul.f32 %v348, %v604
        %v861 = vmul.f32 %v349, %v605
        %v862 = vmul.f32 %v350, %v606
        %v863 = vmul.f32 %v351, %v607
        %v864 = vmul.f32 %v352, %v608
        %v865 = vmul.f32 %v353, %v609
        %v866 = vmul.f32 %v354, %v610
        %v867 = vmul.f32 %v355, %v611
        %v868 = vmul.f32 %v356, %v612
        %v869 = vmul.f32 %v357, %v613
        %v870 = vmul.f32 %v358, %v614
        %v871 = vmul.f32 %v359, %v615
        %v872 = vmul.f32 %v360, %v616
        %v873 = vmul.f32 %v361, %v617
        %v874 = vmul.f32 %v362, %v618
        %v875 = vmul.f32 %v363, %v619
        %v876 = vmul.f32 %v364, %v620
        %v877 = vmul.f32 %v365, %v621
        %v878 = vmul.f32 %v366, %v622
        %v879 = vmul.f32 %v367, %v623
        %v880 = vmul.f32 %v368, %v624
        %v881 = vmul.f32 %v369, %v625
        %v882 = vmul.f32 %v370, %v626
        %v883 = vmul.f32 %v371, %v627
        %v884 = vmul.f32 %v372, %v628
        %v885 = vmul.f32 %v373, %v629
        %v886 = vmul.f32 %v374, %v630
        %v887 = vmul.f32 %v375, %v631
        %v888 = vmul.f32 %v376, %v632
        %v889 = vmul.f32 %v377, %v633
        %v890 = vmul.f32 %v378, %v634
        %v891 = vmul.f32 %v379, %v635
        %v892 = vmul.f32 %v380, %v636
        %v893 = vmul.f32 %v381, %v637
        %v894 = vmul.f32 %v382, %v638
        %v895 = vmul.f32 %v383, %v639
        %v896 = vmul.f32 %v384, %v640
        %v897 = vmul.f32 %v385, %v641
        %v898 = vmul.f32 %v386, %v642
        %v899 = vmul.f32 %v387, %v643
        %v900 = vmul.f32 %v388, %v644
        %v901 = vmul.f32 %v389, %v645
        %v902 = vmul.f32 %v390, %v646
        %v903 = vmul.f32 %v391, %v647
        %v904 = vmul.f32 %v392, %v648
        %v905 = vmul.f32 %v393, %v649
        %v906 = vmul.f32 %v394, %v650
        %v907 = vmul.f32 %v395, %v651
        %v908 = vmul.f32 %v396, %v652
        %v909 = vmul.f32 %v397, %v653
        %v910 = vmul.f32 %v398, %v654
        %v911 = vmul.f32 %v399, %v655
        %v912 = vmul.f32 %v400, %v656
        %v913 = vmul.f32 %v401, %v657
        %v914 = vmul.f32 %v402, %v658
        %v915 = vmul.f32 %v403, %v659
        %v916 = vmul.f32 %v404, %v660
        %v917 = vmul.f32 %v405, %v661
        %v918 = vmul.f32 %v406, %v662
        %v919 = vmul.f32 %v407, %v663
        %v920 = vmul.f32 %v408, %v664
        %v921 = vmul.f32 %v409, %v665
        %v922 = vmul.f32 %v410, %v666
        %v923 = vmul.f32 %v411, %v667
        %v924 = vmul.f32 %v412, %v668
        %v925 = vmul.f32 %v413, %v669
        %v926 = vmul.f32 %v414, %v670
        %v927 = vmul.f32 %v415, %v671
        %v928 = vmul.f32 %v416, %v672
        %v929 = vmul.f32 %v417, %v673
        %v930 = vmul.f32 %v418, %v674
        %v931 = vmul.f32 %v419, %v675
        %v932 = vmul.f32 %v420, %v676
        %v933 = vmul.f32 %v421, %v677
        %v934 = vmul.f32 %v422, %v678
        %v935 = vmul.f32 %v423, %v679
        %v936 = vmul.f32 %v424, %v680
        %v937 = vmul.f32 %v425, %v681
        %v938 = vmul.f32 %v426, %v682
        %v939 = vmul.f32 %v427, %v683
        %v940 = vmul.f32 %v428, %v684
        %v941 = vmul.f32 %v429, %v685
        %v942 = vmul.f32 %v430, %v686
        %v943 = vmul.f32 %v431, %v687
        %v944 = vmul.f32 %v432, %v688
        %v945 = vmul.f32 %v433, %v689
        %v946 = vmul.f32 %v434, %v690
        %v947 = vmul.f32 %v435, %v691
        %v948 = vmul.f32 %v436, %v692
        %v949 = vmul.f32 %v437, %v693
        %v950 = vmul.f32 %v438, %v694
        %v951 = vmul.f32 %v439, %v695
        %v952 = vmul.f32 %v440, %v696
        %v953 = vmul.f32 %v441, %v697
        %v954 = vmul.f32 %v442, %v698
        %v955 = vmul.f32 %v443, %v699
        %v956 = vmul.f32 %v444, %v700
        %v957 = vmul.f32 %v445, %v701
        %v958 = vmul.f32 %v446, %v702
        %v959 = vmul.f32 %v447, %v703
        %v960 = vmul.f32 %v448, %v704
        %v961 = vmul.f32 %v449, %v705
        %v962 = vmul.f32 %v450, %v706
        %v963 = vmul.f32 %v451, %v707
        %v964 = vmul.f32 %v452, %v708
        %v965 = vmul.f32 %v453, %v709
        %v966 = vmul.f32 %v454, %v710
        %v967 = vmul.f32 %v455, %v711
        %v968 = vmul.f32 %v456, %v712
        %v969 = vmul.f32 %v457, %v713
        %v970 = vmul.f32 %v458, %v714
        %v971 = vmul.f32 %v459, %v715
        %v972 = vmul.f32 %v460, %v716
        %v973 = vmul.f32 %v461, %v717
        %v974 = vmul.f32 %v462, %v718
        %975 = vst [vmem:[%s203] sm:$0xff] %v719
        %976 = vst [vmem:[%s203 + $0x8] sm:$0xff] %v720
        %977 = vst [vmem:[%s203 + $0x10] sm:$0xff] %v721
        %978 = vst [vmem:[%s203 + $0x18] sm:$0xff] %v722
        %979 = vst [vmem:[%s203 + $0x20] sm:$0xff] %v723
        %980 = vst [vmem:[%s203 + $0x28] sm:$0xff] %v724
        %981 = vst [vmem:[%s203 + $0x30] sm:$0xff] %v725
        %982 = vst [vmem:[%s203 + $0x38] sm:$0xff] %v726
        %983 = vst [vmem:[%s203 + $0x40] sm:$0xff] %v727
        %984 = vst [vmem:[%s203 + $0x48] sm:$0xff] %v728
        %985 = vst [vmem:[%s203 + $0x50] sm:$0xff] %v729
        %986 = vst [vmem:[%s203 + $0x58] sm:$0xff] %v730
        %987 = vst [vmem:[%s203 + $0x60] sm:$0xff] %v731
        %988 = vst [vmem:[%s203 + $0x68] sm:$0xff] %v732
        %989 = vst [vmem:[%s203 + $0x70] sm:$0xff] %v733
        %990 = vst [vmem:[%s203 + $0x78] sm:$0xff] %v734
        %991 = vst [vmem:[%s203 + $0x80] sm:$0xff] %v735
        %992 = vst [vmem:[%s203 + $0x88] sm:$0xff] %v736
        %993 = vst [vmem:[%s203 + $0x90] sm:$0xff] %v737
        %994 = vst [vmem:[%s203 + $0x98] sm:$0xff] %v738
        %995 = vst [vmem:[%s203 + $0xa0] sm:$0xff] %v739
        %996 = vst [vmem:[%s203 + $0xa8] sm:$0xff] %v740
        %997 = vst [vmem:[%s203 + $0xb0] sm:$0xff] %v741
        %998 = vst [vmem:[%s203 + $0xb8] sm:$0xff] %v742
        %999 = vst [vmem:[%s203 + $0xc0] sm:$0xff] %v743
        %1000 = vst [vmem:[%s203 + $0xc8] sm:$0xff] %v744
        %1001 = vst [vmem:[%s203 + $0xd0] sm:$0xff] %v745
        %1002 = vst [vmem:[%s203 + $0xd8] sm:$0xff] %v746
        %1003 = vst [vmem:[%s203 + $0xe0] sm:$0xff] %v747
        %1004 = vst [vmem:[%s203 + $0xe8] sm:$0xff] %v748
        %1005 = vst [vmem:[%s203 + $0xf0] sm:$0xff] %v749
        %1006 = vst [vmem:[%s203 + $0xf8] sm:$0xff] %v750
        %1007 = vst [vmem:[%s203 + $0x100] sm:$0xff] %v751
        %1008 = vst [vmem:[%s203 + $0x108] sm:$0xff] %v752
        %1009 = vst [vmem:[%s203 + $0x110] sm:$0xff] %v753
        %1010 = vst [vmem:[%s203 + $0x118] sm:$0xff] %v754
        %1011 = vst [vmem:[%s203 + $0x120] sm:$0xff] %v755
        %1012 = vst [vmem:[%s203 + $0x128] sm:$0xff] %v756
        %1013 = vst [vmem:[%s203 + $0x130] sm:$0xff] %v757
        %1014 = vst [vmem:[%s203 + $0x138] sm:$0xff] %v758
        %1015 = vst [vmem:[%s203 + $0x140] sm:$0xff] %v759
        %1016 = vst [vmem:[%s203 + $0x148] sm:$0xff] %v760
        %1017 = vst [vmem:[%s203 + $0x150] sm:$0xff] %v761
        %1018 = vst [vmem:[%s203 + $0x158] sm:$0xff] %v762
        %1019 = vst [vmem:[%s203 + $0x160] sm:$0xff] %v763
        %1020 = vst [vmem:[%s203 + $0x168] sm:$0xff] %v764
        %1021 = vst [vmem:[%s203 + $0x170] sm:$0xff] %v765
        %1022 = vst [vmem:[%s203 + $0x178] sm:$0xff] %v766
        %1023 = vst [vmem:[%s203 + $0x180] sm:$0xff] %v767
        %1024 = vst [vmem:[%s203 + $0x188] sm:$0xff] %v768
        %1025 = vst [vmem:[%s203 + $0x190] sm:$0xff] %v769
        %1026 = vst [vmem:[%s203 + $0x198] sm:$0xff] %v770
        %1027 = vst [vmem:[%s203 + $0x1a0] sm:$0xff] %v771
        %1028 = vst [vmem:[%s203 + $0x1a8] sm:$0xff] %v772
        %1029 = vst [vmem:[%s203 + $0x1b0] sm:$0xff] %v773
        %1030 = vst [vmem:[%s203 + $0x1b8] sm:$0xff] %v774
        %1031 = vst [vmem:[%s203 + $0x1c0] sm:$0xff] %v775
        %1032 = vst [vmem:[%s203 + $0x1c8] sm:$0xff] %v776
        %1033 = vst [vmem:[%s203 + $0x1d0] sm:$0xff] %v777
        %1034 = vst [vmem:[%s203 + $0x1d8] sm:$0xff] %v778
        %1035 = vst [vmem:[%s203 + $0x1e0] sm:$0xff] %v779
        %1036 = vst [vmem:[%s203 + $0x1e8] sm:$0xff] %v780
        %1037 = vst [vmem:[%s203 + $0x1f0] sm:$0xff] %v781
        %1038 = vst [vmem:[%s203 + $0x1f8] sm:$0xff] %v782
        %1039 = vst [vmem:[%s203 + $0x200] sm:$0xff] %v783
        %1040 = vst [vmem:[%s203 + $0x208] sm:$0xff] %v784
        %1041 = vst [vmem:[%s203 + $0x210] sm:$0xff] %v785
        %1042 = vst [vmem:[%s203 + $0x218] sm:$0xff] %v786
        %1043 = vst [vmem:[%s203 + $0x220] sm:$0xff] %v787
        %1044 = vst [vmem:[%s203 + $0x228] sm:$0xff] %v788
        %1045 = vst [vmem:[%s203 + $0x230] sm:$0xff] %v789
        %1046 = vst [vmem:[%s203 + $0x238] sm:$0xff] %v790
        %1047 = vst [vmem:[%s203 + $0x240] sm:$0xff] %v791
        %1048 = vst [vmem:[%s203 + $0x248] sm:$0xff] %v792
        %1049 = vst [vmem:[%s203 + $0x250] sm:$0xff] %v793
        %1050 = vst [vmem:[%s203 + $0x258] sm:$0xff] %v794
        %1051 = vst [vmem:[%s203 + $0x260] sm:$0xff] %v795
        %1052 = vst [vmem:[%s203 + $0x268] sm:$0xff] %v796
        %1053 = vst [vmem:[%s203 + $0x270] sm:$0xff] %v797
        %1054 = vst [vmem:[%s203 + $0x278] sm:$0xff] %v798
        %1055 = vst [vmem:[%s203 + $0x280] sm:$0xff] %v799
        %1056 = vst [vmem:[%s203 + $0x288] sm:$0xff] %v800
        %1057 = vst [vmem:[%s203 + $0x290] sm:$0xff] %v801
        %1058 = vst [vmem:[%s203 + $0x298] sm:$0xff] %v802
        %1059 = vst [vmem:[%s203 + $0x2a0] sm:$0xff] %v803
        %1060 = vst [vmem:[%s203 + $0x2a8] sm:$0xff] %v804
        %1061 = vst [vmem:[%s203 + $0x2b0] sm:$0xff] %v805
        %1062 = vst [vmem:[%s203 + $0x2b8] sm:$0xff] %v806
        %1063 = vst [vmem:[%s203 + $0x2c0] sm:$0xff] %v807
        %1064 = vst [vmem:[%s203 + $0x2c8] sm:$0xff] %v808
        %1065 = vst [vmem:[%s203 + $0x2d0] sm:$0xff] %v809
        %1066 = vst [vmem:[%s203 + $0x2d8] sm:$0xff] %v810
        %1067 = vst [vmem:[%s203 + $0x2e0] sm:$0xff] %v811
        %1068 = vst [vmem:[%s203 + $0x2e8] sm:$0xff] %v812
        %1069 = vst [vmem:[%s203 + $0x2f0] sm:$0xff] %v813
        %1070 = vst [vmem:[%s203 + $0x2f8] sm:$0xff] %v814
        %1071 = vst [vmem:[%s203 + $0x300] sm:$0xff] %v815
        %1072 = vst [vmem:[%s203 + $0x308] sm:$0xff] %v816
        %1073 = vst [vmem:[%s203 + $0x310] sm:$0xff] %v817
        %1074 = vst [vmem:[%s203 + $0x318] sm:$0xff] %v818
        %1075 = vst [vmem:[%s203 + $0x320] sm:$0xff] %v819
        %1076 = vst [vmem:[%s203 + $0x328] sm:$0xff] %v820
        %1077 = vst [vmem:[%s203 + $0x330] sm:$0xff] %v821
        %1078 = vst [vmem:[%s203 + $0x338] sm:$0xff] %v822
        %1079 = vst [vmem:[%s203 + $0x340] sm:$0xff] %v823
        %1080 = vst [vmem:[%s203 + $0x348] sm:$0xff] %v824
        %1081 = vst [vmem:[%s203 + $0x350] sm:$0xff] %v825
        %1082 = vst [vmem:[%s203 + $0x358] sm:$0xff] %v826
        %1083 = vst [vmem:[%s203 + $0x360] sm:$0xff] %v827
        %1084 = vst [vmem:[%s203 + $0x368] sm:$0xff] %v828
        %1085 = vst [vmem:[%s203 + $0x370] sm:$0xff] %v829
        %1086 = vst [vmem:[%s203 + $0x378] sm:$0xff] %v830
        %1087 = vst [vmem:[%s203 + $0x380] sm:$0xff] %v831
        %1088 = vst [vmem:[%s203 + $0x388] sm:$0xff] %v832
        %1089 = vst [vmem:[%s203 + $0x390] sm:$0xff] %v833
        %1090 = vst [vmem:[%s203 + $0x398] sm:$0xff] %v834
        %1091 = vst [vmem:[%s203 + $0x3a0] sm:$0xff] %v835
        %1092 = vst [vmem:[%s203 + $0x3a8] sm:$0xff] %v836
        %1093 = vst [vmem:[%s203 + $0x3b0] sm:$0xff] %v837
        %1094 = vst [vmem:[%s203 + $0x3b8] sm:$0xff] %v838
        %1095 = vst [vmem:[%s203 + $0x3c0] sm:$0xff] %v839
        %1096 = vst [vmem:[%s203 + $0x3c8] sm:$0xff] %v840
        %1097 = vst [vmem:[%s203 + $0x3d0] sm:$0xff] %v841
        %1098 = vst [vmem:[%s203 + $0x3d8] sm:$0xff] %v842
        %1099 = vst [vmem:[%s203 + $0x3e0] sm:$0xff] %v843
        %1100 = vst [vmem:[%s203 + $0x3e8] sm:$0xff] %v844
        %1101 = vst [vmem:[%s203 + $0x3f0] sm:$0xff] %v845
        %1102 = vst [vmem:[%s203 + $0x3f8] sm:$0xff] %v846
        %1103 = vst [vmem:[%s203 + $0x400] sm:$0xff] %v847
        %1104 = vst [vmem:[%s203 + $0x408] sm:$0xff] %v848
        %1105 = vst [vmem:[%s203 + $0x410] sm:$0xff] %v849
        %1106 = vst [vmem:[%s203 + $0x418] sm:$0xff] %v850
        %1107 = vst [vmem:[%s203 + $0x420] sm:$0xff] %v851
        %1108 = vst [vmem:[%s203 + $0x428] sm:$0xff] %v852
        %1109 = vst [vmem:[%s203 + $0x430] sm:$0xff] %v853
        %1110 = vst [vmem:[%s203 + $0x438] sm:$0xff] %v854
        %1111 = vst [vmem:[%s203 + $0x440] sm:$0xff] %v855
        %1112 = vst [vmem:[%s203 + $0x448] sm:$0xff] %v856
        %1113 = vst [vmem:[%s203 + $0x450] sm:$0xff] %v857
        %1114 = vst [vmem:[%s203 + $0x458] sm:$0xff] %v858
        %1115 = vst [vmem:[%s203 + $0x460] sm:$0xff] %v859
        %1116 = vst [vmem:[%s203 + $0x468] sm:$0xff] %v860
        %1117 = vst [vmem:[%s203 + $0x470] sm:$0xff] %v861
        %1118 = vst [vmem:[%s203 + $0x478] sm:$0xff] %v862
        %1119 = vst [vmem:[%s203 + $0x480] sm:$0xff] %v863
        %1120 = vst [vmem:[%s203 + $0x488] sm:$0xff] %v864
        %1121 = vst [vmem:[%s203 + $0x490] sm:$0xff] %v865
        %1122 = vst [vmem:[%s203 + $0x498] sm:$0xff] %v866
        %1123 = vst [vmem:[%s203 + $0x4a0] sm:$0xff] %v867
        %1124 = vst [vmem:[%s203 + $0x4a8] sm:$0xff] %v868
        %1125 = vst [vmem:[%s203 + $0x4b0] sm:$0xff] %v869
        %1126 = vst [vmem:[%s203 + $0x4b8] sm:$0xff] %v870
        %1127 = vst [vmem:[%s203 + $0x4c0] sm:$0xff] %v871
        %1128 = vst [vmem:[%s203 + $0x4c8] sm:$0xff] %v872
        %1129 = vst [vmem:[%s203 + $0x4d0] sm:$0xff] %v873
        %1130 = vst [vmem:[%s203 + $0x4d8] sm:$0xff] %v874
        %1131 = vst [vmem:[%s203 + $0x4e0] sm:$0xff] %v875
        %1132 = vst [vmem:[%s203 + $0x4e8] sm:$0xff] %v876
        %1133 = vst [vmem:[%s203 + $0x4f0] sm:$0xff] %v877
        %1134 = vst [vmem:[%s203 + $0x4f8] sm:$0xff] %v878
        %1135 = vst [vmem:[%s203 + $0x500] sm:$0xff] %v879
        %1136 = vst [vmem:[%s203 + $0x508] sm:$0xff] %v880
        %1137 = vst [vmem:[%s203 + $0x510] sm:$0xff] %v881
        %1138 = vst [vmem:[%s203 + $0x518] sm:$0xff] %v882
        %1139 = vst [vmem:[%s203 + $0x520] sm:$0xff] %v883
        %1140 = vst [vmem:[%s203 + $0x528] sm:$0xff] %v884
        %1141 = vst [vmem:[%s203 + $0x530] sm:$0xff] %v885
        %1142 = vst [vmem:[%s203 + $0x538] sm:$0xff] %v886
        %1143 = vst [vmem:[%s203 + $0x540] sm:$0xff] %v887
        %1144 = vst [vmem:[%s203 + $0x548] sm:$0xff] %v888
        %1145 = vst [vmem:[%s203 + $0x550] sm:$0xff] %v889
        %1146 = vst [vmem:[%s203 + $0x558] sm:$0xff] %v890
        %1147 = vst [vmem:[%s203 + $0x560] sm:$0xff] %v891
        %1148 = vst [vmem:[%s203 + $0x568] sm:$0xff] %v892
        %1149 = vst [vmem:[%s203 + $0x570] sm:$0xff] %v893
        %1150 = vst [vmem:[%s203 + $0x578] sm:$0xff] %v894
        %1151 = vst [vmem:[%s203 + $0x580] sm:$0xff] %v895
        %1152 = vst [vmem:[%s203 + $0x588] sm:$0xff] %v896
        %1153 = vst [vmem:[%s203 + $0x590] sm:$0xff] %v897
        %1154 = vst [vmem:[%s203 + $0x598] sm:$0xff] %v898
        %1155 = vst [vmem:[%s203 + $0x5a0] sm:$0xff] %v899
        %1156 = vst [vmem:[%s203 + $0x5a8] sm:$0xff] %v900
        %1157 = vst [vmem:[%s203 + $0x5b0] sm:$0xff] %v901
        %1158 = vst [vmem:[%s203 + $0x5b8] sm:$0xff] %v902
        %1159 = vst [vmem:[%s203 + $0x5c0] sm:$0xff] %v903
        %1160 = vst [vmem:[%s203 + $0x5c8] sm:$0xff] %v904
        %1161 = vst [vmem:[%s203 + $0x5d0] sm:$0xff] %v905
        %1162 = vst [vmem:[%s203 + $0x5d8] sm:$0xff] %v906
        %1163 = vst [vmem:[%s203 + $0x5e0] sm:$0xff] %v907
        %1164 = vst [vmem:[%s203 + $0x5e8] sm:$0xff] %v908
        %1165 = vst [vmem:[%s203 + $0x5f0] sm:$0xff] %v909
        %1166 = vst [vmem:[%s203 + $0x5f8] sm:$0xff] %v910
        %1167 = vst [vmem:[%s203 + $0x600] sm:$0xff] %v911
        %1168 = vst [vmem:[%s203 + $0x608] sm:$0xff] %v912
        %1169 = vst [vmem:[%s203 + $0x610] sm:$0xff] %v913
        %1170 = vst [vmem:[%s203 + $0x618] sm:$0xff] %v914
        %1171 = vst [vmem:[%s203 + $0x620] sm:$0xff] %v915
        %1172 = vst [vmem:[%s203 + $0x628] sm:$0xff] %v916
        %1173 = vst [vmem:[%s203 + $0x630] sm:$0xff] %v917
        %1174 = vst [vmem:[%s203 + $0x638] sm:$0xff] %v918
        %1175 = vst [vmem:[%s203 + $0x640] sm:$0xff] %v919
        %1176 = vst [vmem:[%s203 + $0x648] sm:$0xff] %v920
        %1177 = vst [vmem:[%s203 + $0x650] sm:$0xff] %v921
        %1178 = vst [vmem:[%s203 + $0x658] sm:$0xff] %v922
        %1179 = vst [vmem:[%s203 + $0x660] sm:$0xff] %v923
        %1180 = vst [vmem:[%s203 + $0x668] sm:$0xff] %v924
        %1181 = vst [vmem:[%s203 + $0x670] sm:$0xff] %v925
        %1182 = vst [vmem:[%s203 + $0x678] sm:$0xff] %v926
        %1183 = vst [vmem:[%s203 + $0x680] sm:$0xff] %v927
        %1184 = vst [vmem:[%s203 + $0x688] sm:$0xff] %v928
        %1185 = vst [vmem:[%s203 + $0x690] sm:$0xff] %v929
        %1186 = vst [vmem:[%s203 + $0x698] sm:$0xff] %v930
        %1187 = vst [vmem:[%s203 + $0x6a0] sm:$0xff] %v931
        %1188 = vst [vmem:[%s203 + $0x6a8] sm:$0xff] %v932
        %1189 = vst [vmem:[%s203 + $0x6b0] sm:$0xff] %v933
        %1190 = vst [vmem:[%s203 + $0x6b8] sm:$0xff] %v934
        %1191 = vst [vmem:[%s203 + $0x6c0] sm:$0xff] %v935
        %1192 = vst [vmem:[%s203 + $0x6c8] sm:$0xff] %v936
        %1193 = vst [vmem:[%s203 + $0x6d0] sm:$0xff] %v937
        %1194 = vst [vmem:[%s203 + $0x6d8] sm:$0xff] %v938
        %1195 = vst [vmem:[%s203 + $0x6e0] sm:$0xff] %v939
        %1196 = vst [vmem:[%s203 + $0x6e8] sm:$0xff] %v940
        %1197 = vst [vmem:[%s203 + $0x6f0] sm:$0xff] %v941
        %1198 = vst [vmem:[%s203 + $0x6f8] sm:$0xff] %v942
        %1199 = vst [vmem:[%s203 + $0x700] sm:$0xff] %v943
        %1200 = vst [vmem:[%s203 + $0x708] sm:$0xff] %v944
        %1201 = vst [vmem:[%s203 + $0x710] sm:$0xff] %v945
        %1202 = vst [vmem:[%s203 + $0x718] sm:$0xff] %v946
        %1203 = vst [vmem:[%s203 + $0x720] sm:$0xff] %v947
        %1204 = vst [vmem:[%s203 + $0x728] sm:$0xff] %v948
        %1205 = vst [vmem:[%s203 + $0x730] sm:$0xff] %v949
        %1206 = vst [vmem:[%s203 + $0x738] sm:$0xff] %v950
        %1207 = vst [vmem:[%s203 + $0x740] sm:$0xff] %v951
        %1208 = vst [vmem:[%s203 + $0x748] sm:$0xff] %v952
        %1209 = vst [vmem:[%s203 + $0x750] sm:$0xff] %v953
        %1210 = vst [vmem:[%s203 + $0x758] sm:$0xff] %v954
        %1211 = vst [vmem:[%s203 + $0x760] sm:$0xff] %v955
        %1212 = vst [vmem:[%s203 + $0x768] sm:$0xff] %v956
        %1213 = vst [vmem:[%s203 + $0x770] sm:$0xff] %v957
        %1214 = vst [vmem:[%s203 + $0x778] sm:$0xff] %v958
        %1215 = vst [vmem:[%s203 + $0x780] sm:$0xff] %v959
        %1216 = vst [vmem:[%s203 + $0x788] sm:$0xff] %v960
        %1217 = vst [vmem:[%s203 + $0x790] sm:$0xff] %v961
        %1218 = vst [vmem:[%s203 + $0x798] sm:$0xff] %v962
        %1219 = vst [vmem:[%s203 + $0x7a0] sm:$0xff] %v963
        %1220 = vst [vmem:[%s203 + $0x7a8] sm:$0xff] %v964
        %1221 = vst [vmem:[%s203 + $0x7b0] sm:$0xff] %v965
        %1222 = vst [vmem:[%s203 + $0x7b8] sm:$0xff] %v966
        %1223 = vst [vmem:[%s203 + $0x7c0] sm:$0xff] %v967
        %1224 = vst [vmem:[%s203 + $0x7c8] sm:$0xff] %v968
        %1225 = vst [vmem:[%s203 + $0x7d0] sm:$0xff] %v969
        %1226 = vst [vmem:[%s203 + $0x7d8] sm:$0xff] %v970
        %1227 = vst [vmem:[%s203 + $0x7e0] sm:$0xff] %v971
        %1228 = vst [vmem:[%s203 + $0x7e8] sm:$0xff] %v972
        %1229 = vst [vmem:[%s203 + $0x7f0] sm:$0xff] %v973
        %1230 = vst [vmem:[%s203 + $0x7f8] sm:$0xff] %v974
        %s1231 = sand.u32 %s82, 1
        %s1232 = scalar_lea.sflag [#allocation4], %s1231
        %s1233 = sand.u32 %s82, 1
        %s1234 = smul.addr %s1233, 2048
        %s1235 = scalar_lea.vmem [#allocation7], %s1234
        // Predicated region
        $region37: #{tpu_custom_call.1} parent=27 // pred_check
          %p1236 = pneg %p92
        $region38: #{tpu_custom_call.1} parent=27 // pred_check_branch
          %1238 = sbr.rel (%p1236) target = $region40
        $region39: #{tpu_custom_call.1} parent=27 // pred_region
          %s1239 = smul.u32 8, %s22
          %s1241 = ssub.s32 32768, 32768
          %1242 = vsyncadd %s1232, %s1241
          %s1243 = smul.addr %s1239, 32
          %s1244 = smul.addr %s1243, 128
          %s1245 = scalar_lea.hbm %s2, %s1244
          %s1246 = sshll.u32 %s1235, 4
          %s1247 = int_to_ptr.vmem [resolvable:$true] %s1246
          %1252 = dma.vmem_to_hbm [thread:$0]  %s1247, 32768, %s1245, %s1232, 4096, 4096, 256
        $region40: #{tpu_custom_call.1} parent=27 // pred_fallthru
          _
      $region28: #{tpu_custom_call.1} parent=5 // pred_fallthru
        _
      %p1253 = scmp.le.s32.totalorder 2, %s17
      // Predicated region
      $region41: #{tpu_custom_call.1} parent=5 // pred_check
        %p1254 = pneg %p1253
      $region42: #{tpu_custom_call.1} parent=5 // pred_check_branch
        %1256 = sbr.rel (%p1254) target = $region44
      $region43: #{tpu_custom_call.1} parent=5 // pred_region
        %s1257 = ssub.s32 %s17, 2
        // Predicated region
        $region45: #{tpu_custom_call.1} parent=43 // pred_check
          %p1258 = pneg %p98
        $region46: #{tpu_custom_call.1} parent=43 // pred_check_branch
          %1260 = sbr.rel (%p1258) target = $region48
        $region47: #{tpu_custom_call.1} parent=43 // pred_region
          %s1261 = sand.u32 %s83, 1
          %s1262 = scalar_lea.sflag [#allocation4], %s1261
          %s1263 = sand.u32 %s83, 1
          %s1264 = smul.addr %s1263, 2048
          %s1265 = scalar_lea.vmem [#allocation7], %s1264
          %1266 = dma.done %s1262, 32768
        $region48: #{tpu_custom_call.1} parent=43 // pred_fallthru
          _
      $region44: #{tpu_custom_call.1} parent=5 // pred_fallthru
        _
    $region6: #{tpu_custom_call.1} parent=1 // loop_footer
      %s21 = sadd.s32 1, %s17
    $region7: #{tpu_custom_call.1} parent=1 // loop_footer_branch
      %16 = sbr.rel target = $region3
    $region8: #{tpu_custom_call.1} parent=1 // loop_exit
      _
    %1267 = vsyncpa [#allocation3], 1
    %s1268 = scalar_lea.sflag [#allocation3], 1
    %1269 = vsyncpa %s1268, 1
    %1270 = vsyncpa [#allocation6], 1
    %s1271 = scalar_lea.sflag [#allocation6], 1
    %1272 = vsyncpa %s1271, 1
    %1273 = vsyncpa [#allocation4], 1
    %s1274 = scalar_lea.sflag [#allocation4], 1
    %1275 = vsyncpa %s1274, 1

</llo_original>
